<compile_context>
chip_gen: v6e
topology: v6e:2x2x1
jax: 0.10.0
libtpu: 0.0.40
codegen_flags: <defaults>
</compile_context>

<pallas_src>
import functools

import jax
import jax.numpy as jnp
from jax.experimental import pallas as pl
from jax.experimental.pallas import tpu as pltpu


IN_PAD = 32      # input features padded 29 -> 32
HID = 128        # all hidden widths padded to 128 lanes
N_SQUARE = 6     # fc2..fc6 + FineTunefc, each padded to (128, 128)


def backgammon_kernel(x_ref, w1_ref, wstack_ref, sp_ref, o_ref):
  """Fused MLP for one batch tile: fc1..fc6 + FineTunefc (ReLU) + output + sigmoid."""
  f32 = jnp.float32
  bf16 = jnp.bfloat16

  # fc1: (TILE_B, 32)bf16 @ (32, 128)bf16 -> f32, + bias, ReLU.
  h = jnp.dot(x_ref[...], w1_ref[...], preferred_element_type=f32)
  h = jnp.maximum(h + sp_ref[0:1, :], 0.0)

  # fc2..fc6 + FineTunefc, all zero-padded to (128, 128).
  # (dropout = identity at inference; relu7 after relu6 is a no-op and dropped;
  #  static Python loop -> fully unrolled, LLO schedules across layers)
  for l in range(N_SQUARE):
    z = jnp.dot(h.astype(bf16), wstack_ref[l], preferred_element_type=f32)
    h = jnp.maximum(z + sp_ref[l + 1:l + 2, :], 0.0)

  # Output layer (32 -> 1), lane-dense: logits^T = Wout_rows @ h^T.
  # h lanes >= 32 are exactly zero (zero-padded weights/biases + ReLU), and
  # rows 1..7 of Wout_rows are zero, so row 0 of `res` is the exact logit row.
  h_t = h.T                                    # (128, TILE_B) f32, XLU transpose
  wout_rows = sp_ref[8:16, :]                  # (8, 128): row 0 = w_out, rest 0
  res = jnp.dot(wout_rows, h_t, preferred_element_type=f32)   # (8, TILE_B)
  logits = res[0:1, :] + sp_ref[7:8, 0:1]      # (1, TILE_B), + output bias
  o_ref[...] = pl.reciprocal(1.0 + jnp.exp(-logits), approx=True)


def _pack_params(params):
  """Pad + pack the 8 (W, b) pairs into (w1, wstack, small_params)."""
  bf16, f32 = jnp.bfloat16, jnp.float32

  w1_raw, _ = params[0]
  w1 = jnp.zeros((IN_PAD, HID), bf16).at[: w1_raw.shape[0], :].set(
      w1_raw.astype(bf16))

  ws = []
  for w, _ in params[1:1 + N_SQUARE]:          # fc2..fc6, FineTunefc
    wp = jnp.zeros((HID, HID), bf16)
    wp = wp.at[: w.shape[0], : w.shape[1]].set(w.astype(bf16))
    ws.append(wp)
  wstack = jnp.stack(ws, axis=0)               # (6, 128, 128) bf16

  # (16, 128) f32 small-params buffer:
  #   rows 0..6 : biases of fc1..fc6, FineTunefc (zero-padded to 128 lanes)
  #   row  7    : output bias in lane 0
  #   rows 8..15: output weight row (padded) then zeros -> matmul LHS (8, 128)
  sp = jnp.zeros((16, HID), f32)
  for i, (_, b) in enumerate(params[:7]):
    sp = sp.at[i, : b.shape[0]].set(b.astype(f32))
  w_out, b_out = params[7]
  sp = sp.at[7, 0].set(b_out[0].astype(f32))
  sp = sp.at[8, : w_out.shape[0]].set(w_out[:, 0].astype(f32))
  return w1, wstack, sp


@functools.partial(jax.jit, static_argnames=("tile_b",))
def backgammon_net_forward(x, params, tile_b=128):
  """params: list of 8 (W, b) pairs with W shaped (in_features, out_features)."""
  B, in_features = x.shape
  n_tiles = pl.cdiv(B, tile_b)
  b_pad = n_tiles * tile_b

  # Batch on sublanes; pad features 29 -> 32, batch to a tile multiple, cast bf16.
  x_p = jnp.zeros((b_pad, IN_PAD), jnp.bfloat16)
  x_p = x_p.at[:B, :in_features].set(x.astype(jnp.bfloat16))

  w1, wstack, sp = _pack_params(params)

  out_row = pl.pallas_call(
      backgammon_kernel,
      out_shape=jax.ShapeDtypeStruct((1, b_pad), jnp.float32),
      grid=(n_tiles,),
      in_specs=[
          pl.BlockSpec((tile_b, IN_PAD), lambda i: (i, 0)),          # x tile
          pl.BlockSpec((IN_PAD, HID), lambda i: (0, 0)),             # fc1 weight
          pl.BlockSpec((N_SQUARE, HID, HID), lambda i: (0, 0, 0)),   # packed weights
          pl.BlockSpec((16, HID), lambda i: (0, 0)),                 # packed small params
      ],
      out_specs=pl.BlockSpec((1, tile_b), lambda i: (0, i)),         # lane-dense output
      compiler_params=pltpu.CompilerParams(
          dimension_semantics=("parallel",)),
  )(x_p, w1, wstack, sp)

  return out_row[0, :B].reshape(B, 1)


def init_params(key, input_size=29):
  """PyTorch-Linear-style init; W stored (in_features, out_features).

  Layers: fc1..fc6, FineTunefc, output (oldoutput / elu are unused in forward).
  """
  dims = [
      (input_size, 128),  # fc1
      (128, 128),         # fc2
      (128, 128),         # fc3
      (128, 64),          # fc4
      (64, 64),           # fc5
      (64, 32),           # fc6
      (32, 32),           # FineTunefc
      (32, 1),            # output
  ]
  params = []
  for i, (fan_in, fan_out) in enumerate(dims):
    kw, kb = jax.random.split(jax.random.fold_in(key, i))
    bound = 1.0 / (fan_in ** 0.5)
    w = jax.random.uniform(kw, (fan_in, fan_out), jnp.float32, -bound, bound)
    b = jax.random.uniform(kb, (fan_out,), jnp.float32, -bound, bound)
    params.append((w, b))
  return params


def reference_forward_f32(x, params):
  """Pure-f32 JAX reference of the PyTorch forward (eval semantics)."""
  h = x.astype(jnp.float32)
  for w, b in params[:-1]:
    h = jnp.maximum(h @ w + b, 0.0)
  w_out, b_out = params[-1]
  return jax.nn.sigmoid(h @ w_out + b_out)


def reference_forward_matched(x, params):
  """Reference with the kernel's numerics: bf16 MXU operands, f32 accumulation."""
  bf16, f32 = jnp.bfloat16, jnp.float32
  h = x.astype(bf16)
  a = None
  for w, b in params[:-1]:
    z = jnp.dot(h, w.astype(bf16), preferred_element_type=f32) + b
    a = jnp.maximum(z, 0.0)
    h = a.astype(bf16)
  w_out, b_out = params[-1]
  logits = jnp.dot(a, w_out, preferred_element_type=f32) + b_out
  return 1.0 / (1.0 + jnp.exp(-logits))


if __name__ == "__main__":
  key = jax.random.PRNGKey(0)
  k_x, k_p = jax.random.split(key)

  batch = 64            # small, not a lane multiple after padding? (padded to 128)
  input_size = 29
  x = jax.random.normal(k_x, (batch, input_size), jnp.float32)
  params = init_params(k_p, input_size=input_size)

  out = backgammon_net_forward(x, params, tile_b=128)
  out = jax.block_until_ready(out)
  assert out.shape == (batch, 1), out.shape

  ref_bf16 = reference_forward_matched(x, params)
  ref_f32 = reference_forward_f32(x, params)
  err_bf16 = float(jnp.max(jnp.abs(out - ref_bf16)))
  err_f32 = float(jnp.max(jnp.abs(out - ref_f32)))
  assert err_bf16 < 5e-3, ("kernel vs matched-precision reference", err_bf16)
  assert err_f32 < 6e-2, ("kernel vs f32 reference", err_f32)

  print("KERNEL_OK")
</pallas_src>

<mosaic_0001>
module attributes {stable_mosaic.version = 11 : i64} {
  func.func @backgammon_kernel(%arg0: i32, %arg1: memref<128x32xbf16, #tpu.memory_space<vmem>>, %arg2: memref<32x128xbf16, #tpu.memory_space<vmem>>, %arg3: memref<6x128x128xbf16, #tpu.memory_space<vmem>>, %arg4: memref<16x128xf32, #tpu.memory_space<vmem>>, %arg5: memref<1x128xf32, #tpu.memory_space<vmem>>) attributes {dimension_semantics = [#tpu.dimension_semantics<parallel>], iteration_bounds = array<i64: 1>, scalar_prefetch = 0 : i64, scratch_operands = 0 : i64, tpu.core_type = #tpu.core_type<tc>, window_params = [{transform_indices = @transform_0, window_bounds = array<i64: 128, 32>}, {pipeline_mode = #tpu.pipeline_mode<synchronous>, transform_indices = @transform_1, window_bounds = array<i64: 32, 128>}, {pipeline_mode = #tpu.pipeline_mode<synchronous>, transform_indices = @transform_2, window_bounds = array<i64: 6, 128, 128>}, {pipeline_mode = #tpu.pipeline_mode<synchronous>, transform_indices = @transform_3, window_bounds = array<i64: 16, 128>}, {transform_indices = @transform_4, window_bounds = array<i64: 1, 128>}]} {
    %c0 = arith.constant 0 : index
    %c0_0 = arith.constant 0 : index
    %0 = vector.load %arg1[%c0, %c0_0] : memref<128x32xbf16, #tpu.memory_space<vmem>>, vector<128x32xbf16>
    %c0_1 = arith.constant 0 : index
    %c0_2 = arith.constant 0 : index
    %1 = vector.load %arg2[%c0_1, %c0_2] : memref<32x128xbf16, #tpu.memory_space<vmem>>, vector<32x128xbf16>
    %cst = arith.constant dense<0.000000e+00> : vector<128x128xf32>
    %2 = tpu.matmul %0, %1, %cst {dimension_numbers = #tpu.dot_dimension_numbers<[1], [0], [0], [1], [0, 0, 1, 1], [], []>} : vector<128x32xbf16>, vector<32x128xbf16>, vector<128x128xf32> -> vector<128x128xf32>
    %c0_3 = arith.constant 0 : index
    %c0_4 = arith.constant 0 : index
    %3 = vector.load %arg4[%c0_3, %c0_4] : memref<16x128xf32, #tpu.memory_space<vmem>>, vector<1x128xf32>
    %4 = vector.broadcast %3 : vector<1x128xf32> to vector<128x128xf32>
    %5 = arith.addf %2, %4 : vector<128x128xf32>
    %cst_5 = arith.constant 0.000000e+00 : f32
    %6 = vector.broadcast %cst_5 : f32 to vector<128x128xf32>
    %7 = arith.maximumf %5, %6 : vector<128x128xf32>
    %8 = arith.truncf %7 : vector<128x128xf32> to vector<128x128xbf16>
    %c0_6 = arith.constant 0 : index
    %c0_7 = arith.constant 0 : index
    %c0_8 = arith.constant 0 : index
    %9 = vector.load %arg3[%c0_6, %c0_7, %c0_8] : memref<6x128x128xbf16, #tpu.memory_space<vmem>>, vector<1x128x128xbf16>
    %10 = vector.shape_cast %9 : vector<1x128x128xbf16> to vector<128x128xbf16>
    %cst_9 = arith.constant dense<0.000000e+00> : vector<128x128xf32>
    %11 = tpu.matmul %8, %10, %cst_9 {dimension_numbers = #tpu.dot_dimension_numbers<[1], [0], [0], [1], [0, 0, 1, 1], [], []>} : vector<128x128xbf16>, vector<128x128xbf16>, vector<128x128xf32> -> vector<128x128xf32>
    %c1 = arith.constant 1 : index
    %c0_10 = arith.constant 0 : index
    %12 = vector.load %arg4[%c1, %c0_10] : memref<16x128xf32, #tpu.memory_space<vmem>>, vector<1x128xf32>
    %13 = vector.broadcast %12 : vector<1x128xf32> to vector<128x128xf32>
    %14 = arith.addf %11, %13 : vector<128x128xf32>
    %cst_11 = arith.constant 0.000000e+00 : f32
    %15 = vector.broadcast %cst_11 : f32 to vector<128x128xf32>
    %16 = arith.maximumf %14, %15 : vector<128x128xf32>
    %17 = arith.truncf %16 : vector<128x128xf32> to vector<128x128xbf16>
    %c1_12 = arith.constant 1 : index
    %c0_13 = arith.constant 0 : index
    %c0_14 = arith.constant 0 : index
    %18 = vector.load %arg3[%c1_12, %c0_13, %c0_14] : memref<6x128x128xbf16, #tpu.memory_space<vmem>>, vector<1x128x128xbf16>
    %19 = vector.shape_cast %18 : vector<1x128x128xbf16> to vector<128x128xbf16>
    %cst_15 = arith.constant dense<0.000000e+00> : vector<128x128xf32>
    %20 = tpu.matmul %17, %19, %cst_15 {dimension_numbers = #tpu.dot_dimension_numbers<[1], [0], [0], [1], [0, 0, 1, 1], [], []>} : vector<128x128xbf16>, vector<128x128xbf16>, vector<128x128xf32> -> vector<128x128xf32>
    %c2 = arith.constant 2 : index
    %c0_16 = arith.constant 0 : index
    %21 = vector.load %arg4[%c2, %c0_16] : memref<16x128xf32, #tpu.memory_space<vmem>>, vector<1x128xf32>
    %22 = vector.broadcast %21 : vector<1x128xf32> to vector<128x128xf32>
    %23 = arith.addf %20, %22 : vector<128x128xf32>
    %cst_17 = arith.constant 0.000000e+00 : f32
    %24 = vector.broadcast %cst_17 : f32 to vector<128x128xf32>
    %25 = arith.maximumf %23, %24 : vector<128x128xf32>
    %26 = arith.truncf %25 : vector<128x128xf32> to vector<128x128xbf16>
    %c2_18 = arith.constant 2 : index
    %c0_19 = arith.constant 0 : index
    %c0_20 = arith.constant 0 : index
    %27 = vector.load %arg3[%c2_18, %c0_19, %c0_20] : memref<6x128x128xbf16, #tpu.memory_space<vmem>>, vector<1x128x128xbf16>
    %28 = vector.shape_cast %27 : vector<1x128x128xbf16> to vector<128x128xbf16>
    %cst_21 = arith.constant dense<0.000000e+00> : vector<128x128xf32>
    %29 = tpu.matmul %26, %28, %cst_21 {dimension_numbers = #tpu.dot_dimension_numbers<[1], [0], [0], [1], [0, 0, 1, 1], [], []>} : vector<128x128xbf16>, vector<128x128xbf16>, vector<128x128xf32> -> vector<128x128xf32>
    %c3 = arith.constant 3 : index
    %c0_22 = arith.constant 0 : index
    %30 = vector.load %arg4[%c3, %c0_22] : memref<16x128xf32, #tpu.memory_space<vmem>>, vector<1x128xf32>
    %31 = vector.broadcast %30 : vector<1x128xf32> to vector<128x128xf32>
    %32 = arith.addf %29, %31 : vector<128x128xf32>
    %cst_23 = arith.constant 0.000000e+00 : f32
    %33 = vector.broadcast %cst_23 : f32 to vector<128x128xf32>
    %34 = arith.maximumf %32, %33 : vector<128x128xf32>
    %35 = arith.truncf %34 : vector<128x128xf32> to vector<128x128xbf16>
    %c3_24 = arith.constant 3 : index
    %c0_25 = arith.constant 0 : index
    %c0_26 = arith.constant 0 : index
    %36 = vector.load %arg3[%c3_24, %c0_25, %c0_26] : memref<6x128x128xbf16, #tpu.memory_space<vmem>>, vector<1x128x128xbf16>
    %37 = vector.shape_cast %36 : vector<1x128x128xbf16> to vector<128x128xbf16>
    %cst_27 = arith.constant dense<0.000000e+00> : vector<128x128xf32>
    %38 = tpu.matmul %35, %37, %cst_27 {dimension_numbers = #tpu.dot_dimension_numbers<[1], [0], [0], [1], [0, 0, 1, 1], [], []>} : vector<128x128xbf16>, vector<128x128xbf16>, vector<128x128xf32> -> vector<128x128xf32>
    %c4 = arith.constant 4 : index
    %c0_28 = arith.constant 0 : index
    %39 = vector.load %arg4[%c4, %c0_28] : memref<16x128xf32, #tpu.memory_space<vmem>>, vector<1x128xf32>
    %40 = vector.broadcast %39 : vector<1x128xf32> to vector<128x128xf32>
    %41 = arith.addf %38, %40 : vector<128x128xf32>
    %cst_29 = arith.constant 0.000000e+00 : f32
    %42 = vector.broadcast %cst_29 : f32 to vector<128x128xf32>
    %43 = arith.maximumf %41, %42 : vector<128x128xf32>
    %44 = arith.truncf %43 : vector<128x128xf32> to vector<128x128xbf16>
    %c4_30 = arith.constant 4 : index
    %c0_31 = arith.constant 0 : index
    %c0_32 = arith.constant 0 : index
    %45 = vector.load %arg3[%c4_30, %c0_31, %c0_32] : memref<6x128x128xbf16, #tpu.memory_space<vmem>>, vector<1x128x128xbf16>
    %46 = vector.shape_cast %45 : vector<1x128x128xbf16> to vector<128x128xbf16>
    %cst_33 = arith.constant dense<0.000000e+00> : vector<128x128xf32>
    %47 = tpu.matmul %44, %46, %cst_33 {dimension_numbers = #tpu.dot_dimension_numbers<[1], [0], [0], [1], [0, 0, 1, 1], [], []>} : vector<128x128xbf16>, vector<128x128xbf16>, vector<128x128xf32> -> vector<128x128xf32>
    %c5 = arith.constant 5 : index
    %c0_34 = arith.constant 0 : index
    %48 = vector.load %arg4[%c5, %c0_34] : memref<16x128xf32, #tpu.memory_space<vmem>>, vector<1x128xf32>
    %49 = vector.broadcast %48 : vector<1x128xf32> to vector<128x128xf32>
    %50 = arith.addf %47, %49 : vector<128x128xf32>
    %cst_35 = arith.constant 0.000000e+00 : f32
    %51 = vector.broadcast %cst_35 : f32 to vector<128x128xf32>
    %52 = arith.maximumf %50, %51 : vector<128x128xf32>
    %53 = arith.truncf %52 : vector<128x128xf32> to vector<128x128xbf16>
    %c5_36 = arith.constant 5 : index
    %c0_37 = arith.constant 0 : index
    %c0_38 = arith.constant 0 : index
    %54 = vector.load %arg3[%c5_36, %c0_37, %c0_38] : memref<6x128x128xbf16, #tpu.memory_space<vmem>>, vector<1x128x128xbf16>
    %55 = vector.shape_cast %54 : vector<1x128x128xbf16> to vector<128x128xbf16>
    %cst_39 = arith.constant dense<0.000000e+00> : vector<128x128xf32>
    %56 = tpu.matmul %53, %55, %cst_39 {dimension_numbers = #tpu.dot_dimension_numbers<[1], [0], [0], [1], [0, 0, 1, 1], [], []>} : vector<128x128xbf16>, vector<128x128xbf16>, vector<128x128xf32> -> vector<128x128xf32>
    %c6 = arith.constant 6 : index
    %c0_40 = arith.constant 0 : index
    %57 = vector.load %arg4[%c6, %c0_40] : memref<16x128xf32, #tpu.memory_space<vmem>>, vector<1x128xf32>
    %58 = vector.broadcast %57 : vector<1x128xf32> to vector<128x128xf32>
    %59 = arith.addf %56, %58 : vector<128x128xf32>
    %cst_41 = arith.constant 0.000000e+00 : f32
    %60 = vector.broadcast %cst_41 : f32 to vector<128x128xf32>
    %61 = arith.maximumf %59, %60 : vector<128x128xf32>
    %62 = tpu.transpose %61, [1, 0] : vector<128x128xf32> -> vector<128x128xf32>
    %c8 = arith.constant 8 : index
    %c0_42 = arith.constant 0 : index
    %63 = vector.load %arg4[%c8, %c0_42] : memref<16x128xf32, #tpu.memory_space<vmem>>, vector<8x128xf32>
    %cst_43 = arith.constant dense<0.000000e+00> : vector<8x128xf32>
    %64 = tpu.matmul %63, %62, %cst_43 {dimension_numbers = #tpu.dot_dimension_numbers<[1], [0], [0], [1], [0, 0, 1, 1], [], []>} : vector<8x128xf32>, vector<128x128xf32>, vector<8x128xf32> -> vector<8x128xf32>
    %65 = vector.extract_strided_slice %64 {offsets = [0, 0], sizes = [1, 128], strides = [1, 1]} : vector<8x128xf32> to vector<1x128xf32>
    %c7 = arith.constant 7 : index
    %c0_44 = arith.constant 0 : index
    %66 = vector.load %arg4[%c7, %c0_44] : memref<16x128xf32, #tpu.memory_space<vmem>>, vector<1x1xf32>
    %67 = vector.broadcast %66 : vector<1x1xf32> to vector<1x128xf32>
    %68 = arith.addf %65, %67 : vector<1x128xf32>
    %cst_45 = arith.constant 0.000000e+00 : f32
    %69 = vector.broadcast %cst_45 : f32 to vector<1x128xf32>
    %70 = arith.subf %69, %68 : vector<1x128xf32>
    %71 = math.exp %70 : vector<1x128xf32>
    %cst_46 = arith.constant 1.000000e+00 : f32
    %72 = vector.broadcast %cst_46 : f32 to vector<1x128xf32>
    %73 = arith.addf %72, %71 : vector<1x128xf32>
    %74 = tpu.reciprocal %73 {approx = true} : vector<1x128xf32> -> vector<1x128xf32>
    %c0_47 = arith.constant 0 : index
    %c0_48 = arith.constant 0 : index
    %75 = vector.load %arg5[%c0_47, %c0_48] : memref<1x128xf32, #tpu.memory_space<vmem>>, vector<1x128xf32>
    tpu.vector_store %arg5[%c0_47, %c0_48], %74 {strides = array<i32>} : memref<1x128xf32, #tpu.memory_space<vmem>>, vector<1x128xf32>,
    return
  }
  func.func @transform_0(%arg0: i32) -> (i32, i32) {
    %c0_i32 = arith.constant 0 : i32
    %c0_i32_0 = arith.constant 0 : i32
    return %arg0, %c0_i32 : i32, i32
  }
  func.func @transform_1(%arg0: i32) -> (i32, i32) {
    %c0_i32 = arith.constant 0 : i32
    %c0_i32_0 = arith.constant 0 : i32
    %c0_i32_1 = arith.constant 0 : i32
    return %c0_i32, %c0_i32_0 : i32, i32
  }
  func.func @transform_2(%arg0: i32) -> (i32, i32, i32) {
    %c0_i32 = arith.constant 0 : i32
    %c0_i32_0 = arith.constant 0 : i32
    %c0_i32_1 = arith.constant 0 : i32
    %c0_i32_2 = arith.constant 0 : i32
    return %c0_i32, %c0_i32_0, %c0_i32_1 : i32, i32, i32
  }
  func.func @transform_3(%arg0: i32) -> (i32, i32) {
    %c0_i32 = arith.constant 0 : i32
    %c0_i32_0 = arith.constant 0 : i32
    %c0_i32_1 = arith.constant 0 : i32
    return %c0_i32, %c0_i32_0 : i32, i32
  }
  func.func @transform_4(%arg0: i32) -> (i32, i32) {
    %c0_i32 = arith.constant 0 : i32
    %c0_i32_0 = arith.constant 0 : i32
    return %c0_i32, %arg0 : i32, i32
  }
}

</mosaic_0001>

<llo_original>
// kernel: backgammon_net_forward.1
$region0: #{backgammon_net_forward.1}
  #allocation0 [shape = 'u32[]', space=smem, size = 0x4, offset = 0x4, fixed_abs, tag = 'smem constant byte address 0x4 - core index']
  #allocation1 [shape = 'u32[144,128]{1,0:T(1,128)}', space=vmem, size = 0x12000, scoped, tag = 'internal scratch']
  %s0 = inlined_call_operand.vmem [shape: bf16[128,32], index: 0, kind: input, shape index: {}]
  %s1 = inlined_call_operand.vmem [shape: bf16[32,128], index: 1, kind: input, shape index: {}]
  %s2 = inlined_call_operand.vmem [shape: bf16[6,128,128], index: 2, kind: input, shape index: {}]
  %s3 = inlined_call_operand.vmem [shape: f32[16,128], index: 3, kind: input, shape index: {}]
  %s4 = inlined_call_operand.vmem [shape: f32[1,128], index: 4, kind: output, shape index: {}]
  %s5 = sld [smem:[#allocation0]]
  $region26: #{backgammon_net_forward.1} parent=0
    _
  %s7 = ssub.s32 1, %s5
  %s8 = scalar_select 0, %s7, %s5
  // Predicated region
  $region2: #{backgammon_net_forward.1} parent=0 // pred_check
    _
  $region3: #{backgammon_net_forward.1} parent=0 // pred_check_branch
    %10 = sbr.rel (0) target = $region5
  $region4: #{backgammon_net_forward.1} parent=0 // pred_region
    _
  $region5: #{backgammon_net_forward.1} parent=0 // pred_fallthru
    _
  // Predicated region
  $region6: #{backgammon_net_forward.1} parent=0 // pred_check
    _
  $region7: #{backgammon_net_forward.1} parent=0 // pred_check_branch
    %12 = sbr.rel (0) target = $region9
  $region8: #{backgammon_net_forward.1} parent=0 // pred_region
    _
  $region9: #{backgammon_net_forward.1} parent=0 // pred_fallthru
    _
  // Predicated region
  $region10: #{backgammon_net_forward.1} parent=0 // pred_check
    _
  $region11: #{backgammon_net_forward.1} parent=0 // pred_check_branch
    %14 = sbr.rel (0) target = $region13
  $region12: #{backgammon_net_forward.1} parent=0 // pred_region
    _
  $region13: #{backgammon_net_forward.1} parent=0 // pred_fallthru
    _
  // Predicated region
  $region14: #{backgammon_net_forward.1} parent=0 // pred_check
    _
  $region15: #{backgammon_net_forward.1} parent=0 // pred_check_branch
    %16 = sbr.rel (0) target = $region17
  $region16: #{backgammon_net_forward.1} parent=0 // pred_region
    _
  $region17: #{backgammon_net_forward.1} parent=0 // pred_fallthru
    _
  %v18 = vld [vmem:[%s0] sm:$0xf]
  %v19 = vld [vmem:[%s0 + $0x4] sm:$0xf]
  %v20 = vld [vmem:[%s0 + $0x8] sm:$0xf]
  %v21 = vld [vmem:[%s0 + $0xc] sm:$0xf]
  %v22 = vld [vmem:[%s0 + $0x10] sm:$0xf]
  %v23 = vld [vmem:[%s0 + $0x14] sm:$0xf]
  %v24 = vld [vmem:[%s0 + $0x18] sm:$0xf]
  %v25 = vld [vmem:[%s0 + $0x1c] sm:$0xf]
  %v26 = vld [vmem:[%s0 + $0x20] sm:$0xf]
  %v27 = vld [vmem:[%s0 + $0x24] sm:$0xf]
  %v28 = vld [vmem:[%s0 + $0x28] sm:$0xf]
  %v29 = vld [vmem:[%s0 + $0x2c] sm:$0xf]
  %v30 = vld [vmem:[%s0 + $0x30] sm:$0xf]
  %v31 = vld [vmem:[%s0 + $0x34] sm:$0xf]
  %v32 = vld [vmem:[%s0 + $0x38] sm:$0xf]
  %v33 = vld [vmem:[%s0 + $0x3c] sm:$0xf]
  %v34 = vld [vmem:[%s1] sm:$0xf]
  %v35 = vld [vmem:[%s1 + $0x4] sm:$0xf]
  %v36 = vld [vmem:[%s1 + $0x8] sm:$0xf]
  %v37 = vld [vmem:[%s1 + $0xc] sm:$0xf]
  %v38 = vld [vmem:[%s3] sm:$0x1]
  %v39 = vlaneseq
  %v40 = vshrl.u32 %v39, 7
  %v41 = vsub.s32 0, %v40
  %v42 = vrot.slane %v38, %v41
  %v59 = vunpack.c.l.b16 %v18
  %v60 = vunpack.c.l.b16 %v19
  %v61 = vunpack.c.l.b16 %v20
  %v62 = vunpack.c.l.b16 %v21
  %v63 = vunpack.c.l.b16 %v22
  %v64 = vunpack.c.l.b16 %v23
  %v65 = vunpack.c.l.b16 %v24
  %v66 = vunpack.c.l.b16 %v25
  %v67 = vunpack.c.l.b16 %v26
  %v68 = vunpack.c.l.b16 %v27
  %v69 = vunpack.c.l.b16 %v28
  %v70 = vunpack.c.l.b16 %v29
  %v71 = vunpack.c.l.b16 %v30
  %v72 = vunpack.c.l.b16 %v31
  %v73 = vunpack.c.l.b16 %v32
  %v74 = vunpack.c.l.b16 %v33
  %v75 = vpack.c.b16 %v60, %v59
  %v76 = vpack.c.b16 %v62, %v61
  %v77 = vpack.c.b16 %v64, %v63
  %v78 = vpack.c.b16 %v66, %v65
  %v79 = vpack.c.b16 %v68, %v67
  %v80 = vpack.c.b16 %v70, %v69
  %v81 = vpack.c.b16 %v72, %v71
  %v82 = vpack.c.b16 %v74, %v73
  %v87 = vunpack.c.l.b16 %v34
  %v88 = vunpack.c.l.b16 %v35
  %v89 = vunpack.c.l.b16 %v36
  %v90 = vunpack.c.l.b16 %v37
  %v91 = vpack.c.b16 %v88, %v87
  %v92 = vpack.c.b16 %v90, %v89
  %vm95 = vcmask 261120
  %v97 = vsel %vm95, %v75, 0
  %v100 = vsel %vm95, %v76, 0
  %v103 = vsel %vm95, %v77, 0
  %v106 = vsel %vm95, %v78, 0
  %v109 = vsel %vm95, %v79, 0
  %v112 = vsel %vm95, %v80, 0
  %v115 = vsel %vm95, %v81, 0
  %v118 = vsel %vm95, %v82, 0
  %120 = vmatprep.subr.bf16.mxu0 0
  %121 = vmatpush1.bf16.msra.mxu0 0
  %122 = vmatprep.subr.bf16.mxu0 0
  %123 = vmatpush1.bf16.msra.mxu0 0
  %124 = vmatprep.subr.bf16.mxu0 0
  %125 = vmatpush1.bf16.msra.mxu0 0
  %126 = vmatprep.subr.bf16.mxu0 0
  %127 = vmatpush1.bf16.msra.mxu0 0
  %128 = vmatprep.subr.bf16.mxu0 0
  %129 = vmatpush1.bf16.msra.mxu0 0
  %130 = vmatprep.subr.bf16.mxu0 0
  %131 = vmatpush1.bf16.msra.mxu0 0
  %132 = vmatprep.subr.bf16.mxu0 0
  %133 = vmatpush1.bf16.msra.mxu0 %v92
  %134 = vmatprep.subr.bf16.mxu0 0
  %135 = vmatpush1.bf16.msra.mxu0 %v91
  %136 = vmatprep.subr.bf16.mxu0 0
  %137 = vmatpush2.bf16.msra.mxu0 0
  %138 = vmatprep.subr.bf16.mxu0 0
  %139 = vmatpush2.bf16.msra.mxu0 0
  %140 = vmatprep.subr.bf16.mxu0 0
  %141 = vmatpush2.bf16.msra.mxu0 0
  %142 = vmatprep.subr.bf16.mxu0 0
  %143 = vmatpush2.bf16.msra.mxu0 0
  %144 = vmatprep.subr.bf16.mxu0 0
  %145 = vmatpush2.bf16.msra.mxu0 0
  %146 = vmatprep.subr.bf16.mxu0 0
  %147 = vmatpush2.bf16.msra.mxu0 0
  %148 = vmatprep.subr.bf16.mxu0 0
  %149 = vmatpush2.bf16.msra.mxu0 0
  %150 = vmatprep.subr.bf16.mxu0 0
  %151 = vmatpush2.bf16.msra.mxu0 0
  %152 = vmatprep.mubr.bf16.mxu0 0
  %153 = vmatmul.mubr.bf16.gmra.mxu0 %v97
  %v154 = vpop.f32.mrf.mxu0
  %v155 = vadd.f32 %v42, %v154
  %v156 = vpop.f32.mrf.mxu0
  %v157 = vpop.f32.mrf.mxu0
  %v158 = vadd.f32 %v42, %v157
  %v159 = vpop.f32.mrf.mxu0
  %160 = vmatprep.mubr.bf16.mxu0 0
  %161 = vmatmul.mubr.bf16.gmra.mxu0 %v100
  %v162 = vpop.f32.mrf.mxu0
  %v163 = vadd.f32 %v42, %v162
  %v164 = vpop.f32.mrf.mxu0
  %v165 = vpop.f32.mrf.mxu0
  %v166 = vadd.f32 %v42, %v165
  %v167 = vpop.f32.mrf.mxu0
  %168 = vmatprep.mubr.bf16.mxu0 0
  %169 = vmatmul.mubr.bf16.gmra.mxu0 %v103
  %v170 = vpop.f32.mrf.mxu0
  %v171 = vadd.f32 %v42, %v170
  %v172 = vpop.f32.mrf.mxu0
  %v173 = vpop.f32.mrf.mxu0
  %v174 = vadd.f32 %v42, %v173
  %v175 = vpop.f32.mrf.mxu0
  %176 = vmatprep.mubr.bf16.mxu0 0
  %177 = vmatmul.mubr.bf16.gmra.mxu0 %v106
  %v178 = vpop.f32.mrf.mxu0
  %v179 = vadd.f32 %v42, %v178
  %v180 = vpop.f32.mrf.mxu0
  %v181 = vpop.f32.mrf.mxu0
  %v182 = vadd.f32 %v42, %v181
  %v183 = vpop.f32.mrf.mxu0
  %184 = vmatprep.mubr.bf16.mxu0 0
  %185 = vmatmul.mubr.bf16.gmra.mxu0 %v109
  %v186 = vpop.f32.mrf.mxu0
  %v187 = vadd.f32 %v42, %v186
  %v188 = vpop.f32.mrf.mxu0
  %v189 = vpop.f32.mrf.mxu0
  %v190 = vadd.f32 %v42, %v189
  %v191 = vpop.f32.mrf.mxu0
  %192 = vmatprep.mubr.bf16.mxu0 0
  %193 = vmatmul.mubr.bf16.gmra.mxu0 %v112
  %v194 = vpop.f32.mrf.mxu0
  %v195 = vadd.f32 %v42, %v194
  %v196 = vpop.f32.mrf.mxu0
  %v197 = vpop.f32.mrf.mxu0
  %v198 = vadd.f32 %v42, %v197
  %v199 = vpop.f32.mrf.mxu0
  %200 = vmatprep.mubr.bf16.mxu0 0
  %201 = vmatmul.mubr.bf16.gmra.mxu0 %v115
  %v202 = vpop.f32.mrf.mxu0
  %v203 = vadd.f32 %v42, %v202
  %v204 = vpop.f32.mrf.mxu0
  %v205 = vpop.f32.mrf.mxu0
  %v206 = vadd.f32 %v42, %v205
  %v207 = vpop.f32.mrf.mxu0
  %208 = vmatprep.mubr.bf16.mxu0 0
  %209 = vmatmul.mubr.bf16.gmra.mxu0 %v118
  %v210 = vpop.f32.mrf.mxu0
  %v211 = vadd.f32 %v42, %v210
  %v212 = vpop.f32.mrf.mxu0
  %v213 = vpop.f32.mrf.mxu0
  %v214 = vadd.f32 %v42, %v213
  %v215 = vpop.f32.mrf.mxu0
  %216 = vdwg.mxu0
  %v217 = vmax.f32 %v155, 0.0
  %v218 = vmax.f32 %v158, 0.0
  %v219 = vmax.f32 %v163, 0.0
  %v220 = vmax.f32 %v166, 0.0
  %v221 = vmax.f32 %v171, 0.0
  %v222 = vmax.f32 %v174, 0.0
  %v223 = vmax.f32 %v179, 0.0
  %v224 = vmax.f32 %v182, 0.0
  %v225 = vmax.f32 %v187, 0.0
  %v226 = vmax.f32 %v190, 0.0
  %v227 = vmax.f32 %v195, 0.0
  %v228 = vmax.f32 %v198, 0.0
  %v229 = vmax.f32 %v203, 0.0
  %v230 = vmax.f32 %v206, 0.0
  %v231 = vmax.f32 %v211, 0.0
  %v232 = vmax.f32 %v214, 0.0
  %v233 = vpack.c.bf16 %v218, %v217
  %v234 = vpack.c.bf16 %v220, %v219
  %v235 = vpack.c.bf16 %v222, %v221
  %v236 = vpack.c.bf16 %v224, %v223
  %v237 = vpack.c.bf16 %v226, %v225
  %v238 = vpack.c.bf16 %v228, %v227
  %v239 = vpack.c.bf16 %v230, %v229
  %v240 = vpack.c.bf16 %v232, %v231
  %v241 = vld [vmem:[%s2] sm:$0xf]
  %v242 = vld [vmem:[%s2 + $0x4] sm:$0xf]
  %v243 = vld [vmem:[%s2 + $0x8] sm:$0xf]
  %v244 = vld [vmem:[%s2 + $0xc] sm:$0xf]
  %v245 = vld [vmem:[%s2 + $0x10] sm:$0xf]
  %v246 = vld [vmem:[%s2 + $0x14] sm:$0xf]
  %v247 = vld [vmem:[%s2 + $0x18] sm:$0xf]
  %v248 = vld [vmem:[%s2 + $0x1c] sm:$0xf]
  %v249 = vld [vmem:[%s2 + $0x20] sm:$0xf]
  %v250 = vld [vmem:[%s2 + $0x24] sm:$0xf]
  %v251 = vld [vmem:[%s2 + $0x28] sm:$0xf]
  %v252 = vld [vmem:[%s2 + $0x2c] sm:$0xf]
  %v253 = vld [vmem:[%s2 + $0x30] sm:$0xf]
  %v254 = vld [vmem:[%s2 + $0x34] sm:$0xf]
  %v255 = vld [vmem:[%s2 + $0x38] sm:$0xf]
  %v256 = vld [vmem:[%s2 + $0x3c] sm:$0xf]
  %v257 = vld [vmem:[%s3 + $0x1] sm:$0x1]
  %v258 = vlaneseq
  %v259 = vshrl.u32 %v258, 7
  %v260 = vsub.s32 0, %v259
  %v261 = vrot.slane %v257, %v260
  %v278 = vunpack.c.l.b16 %v241
  %v279 = vunpack.c.l.b16 %v242
  %v280 = vunpack.c.l.b16 %v243
  %v281 = vunpack.c.l.b16 %v244
  %v282 = vunpack.c.l.b16 %v245
  %v283 = vunpack.c.l.b16 %v246
  %v284 = vunpack.c.l.b16 %v247
  %v285 = vunpack.c.l.b16 %v248
  %v286 = vunpack.c.l.b16 %v249
  %v287 = vunpack.c.l.b16 %v250
  %v288 = vunpack.c.l.b16 %v251
  %v289 = vunpack.c.l.b16 %v252
  %v290 = vunpack.c.l.b16 %v253
  %v291 = vunpack.c.l.b16 %v254
  %v292 = vunpack.c.l.b16 %v255
  %v293 = vunpack.c.l.b16 %v256
  %v294 = vpack.c.b16 %v279, %v278
  %v295 = vpack.c.b16 %v281, %v280
  %v296 = vpack.c.b16 %v283, %v282
  %v297 = vpack.c.b16 %v285, %v284
  %v298 = vpack.c.b16 %v287, %v286
  %v299 = vpack.c.b16 %v289, %v288
  %v300 = vpack.c.b16 %v291, %v290
  %v301 = vpack.c.b16 %v293, %v292
  %310 = vmatprep.subr.bf16.mxu0 0
  %311 = vmatpush1.bf16.msra.mxu0 %v301
  %312 = vmatprep.subr.bf16.mxu0 0
  %313 = vmatpush1.bf16.msra.mxu0 %v300
  %314 = vmatprep.subr.bf16.mxu0 0
  %315 = vmatpush1.bf16.msra.mxu0 %v299
  %316 = vmatprep.subr.bf16.mxu0 0
  %317 = vmatpush1.bf16.msra.mxu0 %v298
  %318 = vmatprep.subr.bf16.mxu0 0
  %319 = vmatpush1.bf16.msra.mxu0 %v297
  %320 = vmatprep.subr.bf16.mxu0 0
  %321 = vmatpush1.bf16.msra.mxu0 %v296
  %322 = vmatprep.subr.bf16.mxu0 0
  %323 = vmatpush1.bf16.msra.mxu0 %v295
  %324 = vmatprep.subr.bf16.mxu0 0
  %325 = vmatpush1.bf16.msra.mxu0 %v294
  %326 = vmatprep.subr.bf16.mxu0 0
  %327 = vmatpush2.bf16.msra.mxu0 0
  %328 = vmatprep.subr.bf16.mxu0 0
  %329 = vmatpush2.bf16.msra.mxu0 0
  %330 = vmatprep.subr.bf16.mxu0 0
  %331 = vmatpush2.bf16.msra.mxu0 0
  %332 = vmatprep.subr.bf16.mxu0 0
  %333 = vmatpush2.bf16.msra.mxu0 0
  %334 = vmatprep.subr.bf16.mxu0 0
  %335 = vmatpush2.bf16.msra.mxu0 0
  %336 = vmatprep.subr.bf16.mxu0 0
  %337 = vmatpush2.bf16.msra.mxu0 0
  %338 = vmatprep.subr.bf16.mxu0 0
  %339 = vmatpush2.bf16.msra.mxu0 0
  %340 = vmatprep.subr.bf16.mxu0 0
  %341 = vmatpush2.bf16.msra.mxu0 0
  %342 = vmatprep.mubr.bf16.mxu0 0
  %343 = vmatmul.mubr.bf16.gmra.mxu0 %v233
  %v344 = vpop.f32.mrf.mxu0
  %v345 = vadd.f32 %v261, %v344
  %v346 = vpop.f32.mrf.mxu0
  %v347 = vpop.f32.mrf.mxu0
  %v348 = vadd.f32 %v261, %v347
  %v349 = vpop.f32.mrf.mxu0
  %350 = vmatprep.mubr.bf16.mxu0 0
  %351 = vmatmul.mubr.bf16.gmra.mxu0 %v234
  %v352 = vpop.f32.mrf.mxu0
  %v353 = vadd.f32 %v261, %v352
  %v354 = vpop.f32.mrf.mxu0
  %v355 = vpop.f32.mrf.mxu0
  %v356 = vadd.f32 %v261, %v355
  %v357 = vpop.f32.mrf.mxu0
  %358 = vmatprep.mubr.bf16.mxu0 0
  %359 = vmatmul.mubr.bf16.gmra.mxu0 %v235
  %v360 = vpop.f32.mrf.mxu0
  %v361 = vadd.f32 %v261, %v360
  %v362 = vpop.f32.mrf.mxu0
  %v363 = vpop.f32.mrf.mxu0
  %v364 = vadd.f32 %v261, %v363
  %v365 = vpop.f32.mrf.mxu0
  %366 = vmatprep.mubr.bf16.mxu0 0
  %367 = vmatmul.mubr.bf16.gmra.mxu0 %v236
  %v368 = vpop.f32.mrf.mxu0
  %v369 = vadd.f32 %v261, %v368
  %v370 = vpop.f32.mrf.mxu0
  %v371 = vpop.f32.mrf.mxu0
  %v372 = vadd.f32 %v261, %v371
  %v373 = vpop.f32.mrf.mxu0
  %374 = vmatprep.mubr.bf16.mxu0 0
  %375 = vmatmul.mubr.bf16.gmra.mxu0 %v237
  %v376 = vpop.f32.mrf.mxu0
  %v377 = vadd.f32 %v261, %v376
  %v378 = vpop.f32.mrf.mxu0
  %v379 = vpop.f32.mrf.mxu0
  %v380 = vadd.f32 %v261, %v379
  %v381 = vpop.f32.mrf.mxu0
  %382 = vmatprep.mubr.bf16.mxu0 0
  %383 = vmatmul.mubr.bf16.gmra.mxu0 %v238
  %v384 = vpop.f32.mrf.mxu0
  %v385 = vadd.f32 %v261, %v384
  %v386 = vpop.f32.mrf.mxu0
  %v387 = vpop.f32.mrf.mxu0
  %v388 = vadd.f32 %v261, %v387
  %v389 = vpop.f32.mrf.mxu0
  %390 = vmatprep.mubr.bf16.mxu0 0
  %391 = vmatmul.mubr.bf16.gmra.mxu0 %v239
  %v392 = vpop.f32.mrf.mxu0
  %v393 = vadd.f32 %v261, %v392
  %v394 = vpop.f32.mrf.mxu0
  %v395 = vpop.f32.mrf.mxu0
  %v396 = vadd.f32 %v261, %v395
  %v397 = vpop.f32.mrf.mxu0
  %398 = vmatprep.mubr.bf16.mxu0 0
  %399 = vmatmul.mubr.bf16.gmra.mxu0 %v240
  %v400 = vpop.f32.mrf.mxu0
  %v401 = vadd.f32 %v261, %v400
  %v402 = vpop.f32.mrf.mxu0
  %v403 = vpop.f32.mrf.mxu0
  %v404 = vadd.f32 %v261, %v403
  %v405 = vpop.f32.mrf.mxu0
  %406 = vdwg.mxu0
  %v407 = vmax.f32 %v345, 0.0
  %v408 = vmax.f32 %v348, 0.0
  %v409 = vmax.f32 %v353, 0.0
  %v410 = vmax.f32 %v356, 0.0
  %v411 = vmax.f32 %v361, 0.0
  %v412 = vmax.f32 %v364, 0.0
  %v413 = vmax.f32 %v369, 0.0
  %v414 = vmax.f32 %v372, 0.0
  %v415 = vmax.f32 %v377, 0.0
  %v416 = vmax.f32 %v380, 0.0
  %v417 = vmax.f32 %v385, 0.0
  %v418 = vmax.f32 %v388, 0.0
  %v419 = vmax.f32 %v393, 0.0
  %v420 = vmax.f32 %v396, 0.0
  %v421 = vmax.f32 %v401, 0.0
  %v422 = vmax.f32 %v404, 0.0
  %v423 = vpack.c.bf16 %v408, %v407
  %v424 = vpack.c.bf16 %v410, %v409
  %v425 = vpack.c.bf16 %v412, %v411
  %v426 = vpack.c.bf16 %v414, %v413
  %v427 = vpack.c.bf16 %v416, %v415
  %v428 = vpack.c.bf16 %v418, %v417
  %v429 = vpack.c.bf16 %v420, %v419
  %v430 = vpack.c.bf16 %v422, %v421
  %s431 = scalar_lea.vmem %s2, 64
  %v432 = vld [vmem:[%s431] sm:$0xf]
  %v433 = vld [vmem:[%s431 + $0x4] sm:$0xf]
  %v434 = vld [vmem:[%s431 + $0x8] sm:$0xf]
  %v435 = vld [vmem:[%s431 + $0xc] sm:$0xf]
  %v436 = vld [vmem:[%s431 + $0x10] sm:$0xf]
  %v437 = vld [vmem:[%s431 + $0x14] sm:$0xf]
  %v438 = vld [vmem:[%s431 + $0x18] sm:$0xf]
  %v439 = vld [vmem:[%s431 + $0x1c] sm:$0xf]
  %v440 = vld [vmem:[%s431 + $0x20] sm:$0xf]
  %v441 = vld [vmem:[%s431 + $0x24] sm:$0xf]
  %v442 = vld [vmem:[%s431 + $0x28] sm:$0xf]
  %v443 = vld [vmem:[%s431 + $0x2c] sm:$0xf]
  %v444 = vld [vmem:[%s431 + $0x30] sm:$0xf]
  %v445 = vld [vmem:[%s431 + $0x34] sm:$0xf]
  %v446 = vld [vmem:[%s431 + $0x38] sm:$0xf]
  %v447 = vld [vmem:[%s431 + $0x3c] sm:$0xf]
  %v448 = vld [vmem:[%s3 + $0x2] sm:$0x1]
  %v449 = vlaneseq
  %v450 = vshrl.u32 %v449, 7
  %v451 = vsub.s32 0, %v450
  %v452 = vrot.slane %v448, %v451
  %v469 = vunpack.c.l.b16 %v432
  %v470 = vunpack.c.l.b16 %v433
  %v471 = vunpack.c.l.b16 %v434
  %v472 = vunpack.c.l.b16 %v435
  %v473 = vunpack.c.l.b16 %v436
  %v474 = vunpack.c.l.b16 %v437
  %v475 = vunpack.c.l.b16 %v438
  %v476 = vunpack.c.l.b16 %v439
  %v477 = vunpack.c.l.b16 %v440
  %v478 = vunpack.c.l.b16 %v441
  %v479 = vunpack.c.l.b16 %v442
  %v480 = vunpack.c.l.b16 %v443
  %v481 = vunpack.c.l.b16 %v444
  %v482 = vunpack.c.l.b16 %v445
  %v483 = vunpack.c.l.b16 %v446
  %v484 = vunpack.c.l.b16 %v447
  %v485 = vpack.c.b16 %v470, %v469
  %v486 = vpack.c.b16 %v472, %v471
  %v487 = vpack.c.b16 %v474, %v473
  %v488 = vpack.c.b16 %v476, %v475
  %v489 = vpack.c.b16 %v478, %v477
  %v490 = vpack.c.b16 %v480, %v479
  %v491 = vpack.c.b16 %v482, %v481
  %v492 = vpack.c.b16 %v484, %v483
  %501 = vmatprep.subr.bf16.mxu0 0
  %502 = vmatpush1.bf16.msra.mxu0 %v492
  %503 = vmatprep.subr.bf16.mxu0 0
  %504 = vmatpush1.bf16.msra.mxu0 %v491
  %505 = vmatprep.subr.bf16.mxu0 0
  %506 = vmatpush1.bf16.msra.mxu0 %v490
  %507 = vmatprep.subr.bf16.mxu0 0
  %508 = vmatpush1.bf16.msra.mxu0 %v489
  %509 = vmatprep.subr.bf16.mxu0 0
  %510 = vmatpush1.bf16.msra.mxu0 %v488
  %511 = vmatprep.subr.bf16.mxu0 0
  %512 = vmatpush1.bf16.msra.mxu0 %v487
  %513 = vmatprep.subr.bf16.mxu0 0
  %514 = vmatpush1.bf16.msra.mxu0 %v486
  %515 = vmatprep.subr.bf16.mxu0 0
  %516 = vmatpush1.bf16.msra.mxu0 %v485
  %517 = vmatprep.subr.bf16.mxu0 0
  %518 = vmatpush2.bf16.msra.mxu0 0
  %519 = vmatprep.subr.bf16.mxu0 0
  %520 = vmatpush2.bf16.msra.mxu0 0
  %521 = vmatprep.subr.bf16.mxu0 0
  %522 = vmatpush2.bf16.msra.mxu0 0
  %523 = vmatprep.subr.bf16.mxu0 0
  %524 = vmatpush2.bf16.msra.mxu0 0
  %525 = vmatprep.subr.bf16.mxu0 0
  %526 = vmatpush2.bf16.msra.mxu0 0
  %527 = vmatprep.subr.bf16.mxu0 0
  %528 = vmatpush2.bf16.msra.mxu0 0
  %529 = vmatprep.subr.bf16.mxu0 0
  %530 = vmatpush2.bf16.msra.mxu0 0
  %531 = vmatprep.subr.bf16.mxu0 0
  %532 = vmatpush2.bf16.msra.mxu0 0
  %533 = vmatprep.mubr.bf16.mxu0 0
  %534 = vmatmul.mubr.bf16.gmra.mxu0 %v423
  %v535 = vpop.f32.mrf.mxu0
  %v536 = vadd.f32 %v452, %v535
  %v537 = vpop.f32.mrf.mxu0
  %v538 = vpop.f32.mrf.mxu0
  %v539 = vadd.f32 %v452, %v538
  %v540 = vpop.f32.mrf.mxu0
  %541 = vmatprep.mubr.bf16.mxu0 0
  %542 = vmatmul.mubr.bf16.gmra.mxu0 %v424
  %v543 = vpop.f32.mrf.mxu0
  %v544 = vadd.f32 %v452, %v543
  %v545 = vpop.f32.mrf.mxu0
  %v546 = vpop.f32.mrf.mxu0
  %v547 = vadd.f32 %v452, %v546
  %v548 = vpop.f32.mrf.mxu0
  %549 = vmatprep.mubr.bf16.mxu0 0
  %550 = vmatmul.mubr.bf16.gmra.mxu0 %v425
  %v551 = vpop.f32.mrf.mxu0
  %v552 = vadd.f32 %v452, %v551
  %v553 = vpop.f32.mrf.mxu0
  %v554 = vpop.f32.mrf.mxu0
  %v555 = vadd.f32 %v452, %v554
  %v556 = vpop.f32.mrf.mxu0
  %557 = vmatprep.mubr.bf16.mxu0 0
  %558 = vmatmul.mubr.bf16.gmra.mxu0 %v426
  %v559 = vpop.f32.mrf.mxu0
  %v560 = vadd.f32 %v452, %v559
  %v561 = vpop.f32.mrf.mxu0
  %v562 = vpop.f32.mrf.mxu0
  %v563 = vadd.f32 %v452, %v562
  %v564 = vpop.f32.mrf.mxu0
  %565 = vmatprep.mubr.bf16.mxu0 0
  %566 = vmatmul.mubr.bf16.gmra.mxu0 %v427
  %v567 = vpop.f32.mrf.mxu0
  %v568 = vadd.f32 %v452, %v567
  %v569 = vpop.f32.mrf.mxu0
  %v570 = vpop.f32.mrf.mxu0
  %v571 = vadd.f32 %v452, %v570
  %v572 = vpop.f32.mrf.mxu0
  %573 = vmatprep.mubr.bf16.mxu0 0
  %574 = vmatmul.mubr.bf16.gmra.mxu0 %v428
  %v575 = vpop.f32.mrf.mxu0
  %v576 = vadd.f32 %v452, %v575
  %v577 = vpop.f32.mrf.mxu0
  %v578 = vpop.f32.mrf.mxu0
  %v579 = vadd.f32 %v452, %v578
  %v580 = vpop.f32.mrf.mxu0
  %581 = vmatprep.mubr.bf16.mxu0 0
  %582 = vmatmul.mubr.bf16.gmra.mxu0 %v429
  %v583 = vpop.f32.mrf.mxu0
  %v584 = vadd.f32 %v452, %v583
  %v585 = vpop.f32.mrf.mxu0
  %v586 = vpop.f32.mrf.mxu0
  %v587 = vadd.f32 %v452, %v586
  %v588 = vpop.f32.mrf.mxu0
  %589 = vmatprep.mubr.bf16.mxu0 0
  %590 = vmatmul.mubr.bf16.gmra.mxu0 %v430
  %v591 = vpop.f32.mrf.mxu0
  %v592 = vadd.f32 %v452, %v591
  %v593 = vpop.f32.mrf.mxu0
  %v594 = vpop.f32.mrf.mxu0
  %v595 = vadd.f32 %v452, %v594
  %v596 = vpop.f32.mrf.mxu0
  %597 = vdwg.mxu0
  %v598 = vmax.f32 %v536, 0.0
  %v599 = vmax.f32 %v539, 0.0
  %v600 = vmax.f32 %v544, 0.0
  %v601 = vmax.f32 %v547, 0.0
  %v602 = vmax.f32 %v552, 0.0
  %v603 = vmax.f32 %v555, 0.0
  %v604 = vmax.f32 %v560, 0.0
  %v605 = vmax.f32 %v563, 0.0
  %v606 = vmax.f32 %v568, 0.0
  %v607 = vmax.f32 %v571, 0.0
  %v608 = vmax.f32 %v576, 0.0
  %v609 = vmax.f32 %v579, 0.0
  %v610 = vmax.f32 %v584, 0.0
  %v611 = vmax.f32 %v587, 0.0
  %v612 = vmax.f32 %v592, 0.0
  %v613 = vmax.f32 %v595, 0.0
  %v614 = vpack.c.bf16 %v599, %v598
  %v615 = vpack.c.bf16 %v601, %v600
  %v616 = vpack.c.bf16 %v603, %v602
  %v617 = vpack.c.bf16 %v605, %v604
  %v618 = vpack.c.bf16 %v607, %v606
  %v619 = vpack.c.bf16 %v609, %v608
  %v620 = vpack.c.bf16 %v611, %v610
  %v621 = vpack.c.bf16 %v613, %v612
  %s622 = scalar_lea.vmem %s2, 128
  %v623 = vld [vmem:[%s622] sm:$0xf]
  %v624 = vld [vmem:[%s622 + $0x4] sm:$0xf]
  %v625 = vld [vmem:[%s622 + $0x8] sm:$0xf]
  %v626 = vld [vmem:[%s622 + $0xc] sm:$0xf]
  %v627 = vld [vmem:[%s622 + $0x10] sm:$0xf]
  %v628 = vld [vmem:[%s622 + $0x14] sm:$0xf]
  %v629 = vld [vmem:[%s622 + $0x18] sm:$0xf]
  %v630 = vld [vmem:[%s622 + $0x1c] sm:$0xf]
  %v631 = vld [vmem:[%s622 + $0x20] sm:$0xf]
  %v632 = vld [vmem:[%s622 + $0x24] sm:$0xf]
  %v633 = vld [vmem:[%s622 + $0x28] sm:$0xf]
  %v634 = vld [vmem:[%s622 + $0x2c] sm:$0xf]
  %v635 = vld [vmem:[%s622 + $0x30] sm:$0xf]
  %v636 = vld [vmem:[%s622 + $0x34] sm:$0xf]
  %v637 = vld [vmem:[%s622 + $0x38] sm:$0xf]
  %v638 = vld [vmem:[%s622 + $0x3c] sm:$0xf]
  %v639 = vld [vmem:[%s3 + $0x3] sm:$0x1]
  %v640 = vlaneseq
  %v641 = vshrl.u32 %v640, 7
  %v642 = vsub.s32 0, %v641
  %v643 = vrot.slane %v639, %v642
  %v660 = vunpack.c.l.b16 %v623
  %v661 = vunpack.c.l.b16 %v624
  %v662 = vunpack.c.l.b16 %v625
  %v663 = vunpack.c.l.b16 %v626
  %v664 = vunpack.c.l.b16 %v627
  %v665 = vunpack.c.l.b16 %v628
  %v666 = vunpack.c.l.b16 %v629
  %v667 = vunpack.c.l.b16 %v630
  %v668 = vunpack.c.l.b16 %v631
  %v669 = vunpack.c.l.b16 %v632
  %v670 = vunpack.c.l.b16 %v633
  %v671 = vunpack.c.l.b16 %v634
  %v672 = vunpack.c.l.b16 %v635
  %v673 = vunpack.c.l.b16 %v636
  %v674 = vunpack.c.l.b16 %v637
  %v675 = vunpack.c.l.b16 %v638
  %v676 = vpack.c.b16 %v661, %v660
  %v677 = vpack.c.b16 %v663, %v662
  %v678 = vpack.c.b16 %v665, %v664
  %v679 = vpack.c.b16 %v667, %v666
  %v680 = vpack.c.b16 %v669, %v668
  %v681 = vpack.c.b16 %v671, %v670
  %v682 = vpack.c.b16 %v673, %v672
  %v683 = vpack.c.b16 %v675, %v674
  %692 = vmatprep.subr.bf16.mxu0 0
  %693 = vmatpush1.bf16.msra.mxu0 %v683
  %694 = vmatprep.subr.bf16.mxu0 0
  %695 = vmatpush1.bf16.msra.mxu0 %v682
  %696 = vmatprep.subr.bf16.mxu0 0
  %697 = vmatpush1.bf16.msra.mxu0 %v681
  %698 = vmatprep.subr.bf16.mxu0 0
  %699 = vmatpush1.bf16.msra.mxu0 %v680
  %700 = vmatprep.subr.bf16.mxu0 0
  %701 = vmatpush1.bf16.msra.mxu0 %v679
  %702 = vmatprep.subr.bf16.mxu0 0
  %703 = vmatpush1.bf16.msra.mxu0 %v678
  %704 = vmatprep.subr.bf16.mxu0 0
  %705 = vmatpush1.bf16.msra.mxu0 %v677
  %706 = vmatprep.subr.bf16.mxu0 0
  %707 = vmatpush1.bf16.msra.mxu0 %v676
  %708 = vmatprep.subr.bf16.mxu0 0
  %709 = vmatpush2.bf16.msra.mxu0 0
  %710 = vmatprep.subr.bf16.mxu0 0
  %711 = vmatpush2.bf16.msra.mxu0 0
  %712 = vmatprep.subr.bf16.mxu0 0
  %713 = vmatpush2.bf16.msra.mxu0 0
  %714 = vmatprep.subr.bf16.mxu0 0
  %715 = vmatpush2.bf16.msra.mxu0 0
  %716 = vmatprep.subr.bf16.mxu0 0
  %717 = vmatpush2.bf16.msra.mxu0 0
  %718 = vmatprep.subr.bf16.mxu0 0
  %719 = vmatpush2.bf16.msra.mxu0 0
  %720 = vmatprep.subr.bf16.mxu0 0
  %721 = vmatpush2.bf16.msra.mxu0 0
  %722 = vmatprep.subr.bf16.mxu0 0
  %723 = vmatpush2.bf16.msra.mxu0 0
  %724 = vmatprep.mubr.bf16.mxu0 0
  %725 = vmatmul.mubr.bf16.gmra.mxu0 %v614
  %v726 = vpop.f32.mrf.mxu0
  %v727 = vadd.f32 %v643, %v726
  %v728 = vpop.f32.mrf.mxu0
  %v729 = vpop.f32.mrf.mxu0
  %v730 = vadd.f32 %v643, %v729
  %v731 = vpop.f32.mrf.mxu0
  %732 = vmatprep.mubr.bf16.mxu0 0
  %733 = vmatmul.mubr.bf16.gmra.mxu0 %v615
  %v734 = vpop.f32.mrf.mxu0
  %v735 = vadd.f32 %v643, %v734
  %v736 = vpop.f32.mrf.mxu0
  %v737 = vpop.f32.mrf.mxu0
  %v738 = vadd.f32 %v643, %v737
  %v739 = vpop.f32.mrf.mxu0
  %740 = vmatprep.mubr.bf16.mxu0 0
  %741 = vmatmul.mubr.bf16.gmra.mxu0 %v616
  %v742 = vpop.f32.mrf.mxu0
  %v743 = vadd.f32 %v643, %v742
  %v744 = vpop.f32.mrf.mxu0
  %v745 = vpop.f32.mrf.mxu0
  %v746 = vadd.f32 %v643, %v745
  %v747 = vpop.f32.mrf.mxu0
  %748 = vmatprep.mubr.bf16.mxu0 0
  %749 = vmatmul.mubr.bf16.gmra.mxu0 %v617
  %v750 = vpop.f32.mrf.mxu0
  %v751 = vadd.f32 %v643, %v750
  %v752 = vpop.f32.mrf.mxu0
  %v753 = vpop.f32.mrf.mxu0
  %v754 = vadd.f32 %v643, %v753
  %v755 = vpop.f32.mrf.mxu0
  %756 = vmatprep.mubr.bf16.mxu0 0
  %757 = vmatmul.mubr.bf16.gmra.mxu0 %v618
  %v758 = vpop.f32.mrf.mxu0
  %v759 = vadd.f32 %v643, %v758
  %v760 = vpop.f32.mrf.mxu0
  %v761 = vpop.f32.mrf.mxu0
  %v762 = vadd.f32 %v643, %v761
  %v763 = vpop.f32.mrf.mxu0
  %764 = vmatprep.mubr.bf16.mxu0 0
  %765 = vmatmul.mubr.bf16.gmra.mxu0 %v619
  %v766 = vpop.f32.mrf.mxu0
  %v767 = vadd.f32 %v643, %v766
  %v768 = vpop.f32.mrf.mxu0
  %v769 = vpop.f32.mrf.mxu0
  %v770 = vadd.f32 %v643, %v769
  %v771 = vpop.f32.mrf.mxu0
  %772 = vmatprep.mubr.bf16.mxu0 0
  %773 = vmatmul.mubr.bf16.gmra.mxu0 %v620
  %v774 = vpop.f32.mrf.mxu0
  %v775 = vadd.f32 %v643, %v774
  %v776 = vpop.f32.mrf.mxu0
  %v777 = vpop.f32.mrf.mxu0
  %v778 = vadd.f32 %v643, %v777
  %v779 = vpop.f32.mrf.mxu0
  %780 = vmatprep.mubr.bf16.mxu0 0
  %781 = vmatmul.mubr.bf16.gmra.mxu0 %v621
  %v782 = vpop.f32.mrf.mxu0
  %v783 = vadd.f32 %v643, %v782
  %v784 = vpop.f32.mrf.mxu0
  %v785 = vpop.f32.mrf.mxu0
  %v786 = vadd.f32 %v643, %v785
  %v787 = vpop.f32.mrf.mxu0
  %788 = vdwg.mxu0
  %v789 = vmax.f32 %v727, 0.0
  %v790 = vmax.f32 %v730, 0.0
  %v791 = vmax.f32 %v735, 0.0
  %v792 = vmax.f32 %v738, 0.0
  %v793 = vmax.f32 %v743, 0.0
  %v794 = vmax.f32 %v746, 0.0
  %v795 = vmax.f32 %v751, 0.0
  %v796 = vmax.f32 %v754, 0.0
  %v797 = vmax.f32 %v759, 0.0
  %v798 = vmax.f32 %v762, 0.0
  %v799 = vmax.f32 %v767, 0.0
  %v800 = vmax.f32 %v770, 0.0
  %v801 = vmax.f32 %v775, 0.0
  %v802 = vmax.f32 %v778, 0.0
  %v803 = vmax.f32 %v783, 0.0
  %v804 = vmax.f32 %v786, 0.0
  %v805 = vpack.c.bf16 %v790, %v789
  %v806 = vpack.c.bf16 %v792, %v791
  %v807 = vpack.c.bf16 %v794, %v793
  %v808 = vpack.c.bf16 %v796, %v795
  %v809 = vpack.c.bf16 %v798, %v797
  %v810 = vpack.c.bf16 %v800, %v799
  %v811 = vpack.c.bf16 %v802, %v801
  %v812 = vpack.c.bf16 %v804, %v803
  %s813 = scalar_lea.vmem %s2, 192
  %v814 = vld [vmem:[%s813] sm:$0xf]
  %v815 = vld [vmem:[%s813 + $0x4] sm:$0xf]
  %v816 = vld [vmem:[%s813 + $0x8] sm:$0xf]
  %v817 = vld [vmem:[%s813 + $0xc] sm:$0xf]
  %v818 = vld [vmem:[%s813 + $0x10] sm:$0xf]
  %v819 = vld [vmem:[%s813 + $0x14] sm:$0xf]
  %v820 = vld [vmem:[%s813 + $0x18] sm:$0xf]
  %v821 = vld [vmem:[%s813 + $0x1c] sm:$0xf]
  %v822 = vld [vmem:[%s813 + $0x20] sm:$0xf]
  %v823 = vld [vmem:[%s813 + $0x24] sm:$0xf]
  %v824 = vld [vmem:[%s813 + $0x28] sm:$0xf]
  %v825 = vld [vmem:[%s813 + $0x2c] sm:$0xf]
  %v826 = vld [vmem:[%s813 + $0x30] sm:$0xf]
  %v827 = vld [vmem:[%s813 + $0x34] sm:$0xf]
  %v828 = vld [vmem:[%s813 + $0x38] sm:$0xf]
  %v829 = vld [vmem:[%s813 + $0x3c] sm:$0xf]
  %v830 = vld [vmem:[%s3 + $0x4] sm:$0x1]
  %v831 = vlaneseq
  %v832 = vshrl.u32 %v831, 7
  %v833 = vsub.s32 0, %v832
  %v834 = vrot.slane %v830, %v833
  %v851 = vunpack.c.l.b16 %v814
  %v852 = vunpack.c.l.b16 %v815
  %v853 = vunpack.c.l.b16 %v816
  %v854 = vunpack.c.l.b16 %v817
  %v855 = vunpack.c.l.b16 %v818
  %v856 = vunpack.c.l.b16 %v819
  %v857 = vunpack.c.l.b16 %v820
  %v858 = vunpack.c.l.b16 %v821
  %v859 = vunpack.c.l.b16 %v822
  %v860 = vunpack.c.l.b16 %v823
  %v861 = vunpack.c.l.b16 %v824
  %v862 = vunpack.c.l.b16 %v825
  %v863 = vunpack.c.l.b16 %v826
  %v864 = vunpack.c.l.b16 %v827
  %v865 = vunpack.c.l.b16 %v828
  %v866 = vunpack.c.l.b16 %v829
  %v867 = vpack.c.b16 %v852, %v851
  %v868 = vpack.c.b16 %v854, %v853
  %v869 = vpack.c.b16 %v856, %v855
  %v870 = vpack.c.b16 %v858, %v857
  %v871 = vpack.c.b16 %v860, %v859
  %v872 = vpack.c.b16 %v862, %v861
  %v873 = vpack.c.b16 %v864, %v863
  %v874 = vpack.c.b16 %v866, %v865
  %883 = vmatprep.subr.bf16.mxu0 0
  %884 = vmatpush1.bf16.msra.mxu0 %v874
  %885 = vmatprep.subr.bf16.mxu0 0
  %886 = vmatpush1.bf16.msra.mxu0 %v873
  %887 = vmatprep.subr.bf16.mxu0 0
  %888 = vmatpush1.bf16.msra.mxu0 %v872
  %889 = vmatprep.subr.bf16.mxu0 0
  %890 = vmatpush1.bf16.msra.mxu0 %v871
  %891 = vmatprep.subr.bf16.mxu0 0
  %892 = vmatpush1.bf16.msra.mxu0 %v870
  %893 = vmatprep.subr.bf16.mxu0 0
  %894 = vmatpush1.bf16.msra.mxu0 %v869
  %895 = vmatprep.subr.bf16.mxu0 0
  %896 = vmatpush1.bf16.msra.mxu0 %v868
  %897 = vmatprep.subr.bf16.mxu0 0
  %898 = vmatpush1.bf16.msra.mxu0 %v867
  %899 = vmatprep.subr.bf16.mxu0 0
  %900 = vmatpush2.bf16.msra.mxu0 0
  %901 = vmatprep.subr.bf16.mxu0 0
  %902 = vmatpush2.bf16.msra.mxu0 0
  %903 = vmatprep.subr.bf16.mxu0 0
  %904 = vmatpush2.bf16.msra.mxu0 0
  %905 = vmatprep.subr.bf16.mxu0 0
  %906 = vmatpush2.bf16.msra.mxu0 0
  %907 = vmatprep.subr.bf16.mxu0 0
  %908 = vmatpush2.bf16.msra.mxu0 0
  %909 = vmatprep.subr.bf16.mxu0 0
  %910 = vmatpush2.bf16.msra.mxu0 0
  %911 = vmatprep.subr.bf16.mxu0 0
  %912 = vmatpush2.bf16.msra.mxu0 0
  %913 = vmatprep.subr.bf16.mxu0 0
  %914 = vmatpush2.bf16.msra.mxu0 0
  %915 = vmatprep.mubr.bf16.mxu0 0
  %916 = vmatmul.mubr.bf16.gmra.mxu0 %v805
  %v917 = vpop.f32.mrf.mxu0
  %v918 = vadd.f32 %v834, %v917
  %v919 = vpop.f32.mrf.mxu0
  %v920 = vpop.f32.mrf.mxu0
  %v921 = vadd.f32 %v834, %v920
  %v922 = vpop.f32.mrf.mxu0
  %923 = vmatprep.mubr.bf16.mxu0 0
  %924 = vmatmul.mubr.bf16.gmra.mxu0 %v806
  %v925 = vpop.f32.mrf.mxu0
  %v926 = vadd.f32 %v834, %v925
  %v927 = vpop.f32.mrf.mxu0
  %v928 = vpop.f32.mrf.mxu0
  %v929 = vadd.f32 %v834, %v928
  %v930 = vpop.f32.mrf.mxu0
  %931 = vmatprep.mubr.bf16.mxu0 0
  %932 = vmatmul.mubr.bf16.gmra.mxu0 %v807
  %v933 = vpop.f32.mrf.mxu0
  %v934 = vadd.f32 %v834, %v933
  %v935 = vpop.f32.mrf.mxu0
  %v936 = vpop.f32.mrf.mxu0
  %v937 = vadd.f32 %v834, %v936
  %v938 = vpop.f32.mrf.mxu0
  %939 = vmatprep.mubr.bf16.mxu0 0
  %940 = vmatmul.mubr.bf16.gmra.mxu0 %v808
  %v941 = vpop.f32.mrf.mxu0
  %v942 = vadd.f32 %v834, %v941
  %v943 = vpop.f32.mrf.mxu0
  %v944 = vpop.f32.mrf.mxu0
  %v945 = vadd.f32 %v834, %v944
  %v946 = vpop.f32.mrf.mxu0
  %947 = vmatprep.mubr.bf16.mxu0 0
  %948 = vmatmul.mubr.bf16.gmra.mxu0 %v809
  %v949 = vpop.f32.mrf.mxu0
  %v950 = vadd.f32 %v834, %v949
  %v951 = vpop.f32.mrf.mxu0
  %v952 = vpop.f32.mrf.mxu0
  %v953 = vadd.f32 %v834, %v952
  %v954 = vpop.f32.mrf.mxu0
  %955 = vmatprep.mubr.bf16.mxu0 0
  %956 = vmatmul.mubr.bf16.gmra.mxu0 %v810
  %v957 = vpop.f32.mrf.mxu0
  %v958 = vadd.f32 %v834, %v957
  %v959 = vpop.f32.mrf.mxu0
  %v960 = vpop.f32.mrf.mxu0
  %v961 = vadd.f32 %v834, %v960
  %v962 = vpop.f32.mrf.mxu0
  %963 = vmatprep.mubr.bf16.mxu0 0
  %964 = vmatmul.mubr.bf16.gmra.mxu0 %v811
  %v965 = vpop.f32.mrf.mxu0
  %v966 = vadd.f32 %v834, %v965
  %v967 = vpop.f32.mrf.mxu0
  %v968 = vpop.f32.mrf.mxu0
  %v969 = vadd.f32 %v834, %v968
  %v970 = vpop.f32.mrf.mxu0
  %971 = vmatprep.mubr.bf16.mxu0 0
  %972 = vmatmul.mubr.bf16.gmra.mxu0 %v812
  %v973 = vpop.f32.mrf.mxu0
  %v974 = vadd.f32 %v834, %v973
  %v975 = vpop.f32.mrf.mxu0
  %v976 = vpop.f32.mrf.mxu0
  %v977 = vadd.f32 %v834, %v976
  %v978 = vpop.f32.mrf.mxu0
  %979 = vdwg.mxu0
  %v980 = vmax.f32 %v918, 0.0
  %v981 = vmax.f32 %v921, 0.0
  %v982 = vmax.f32 %v926, 0.0
  %v983 = vmax.f32 %v929, 0.0
  %v984 = vmax.f32 %v934, 0.0
  %v985 = vmax.f32 %v937, 0.0
  %v986 = vmax.f32 %v942, 0.0
  %v987 = vmax.f32 %v945, 0.0
  %v988 = vmax.f32 %v950, 0.0
  %v989 = vmax.f32 %v953, 0.0
  %v990 = vmax.f32 %v958, 0.0
  %v991 = vmax.f32 %v961, 0.0
  %v992 = vmax.f32 %v966, 0.0
  %v993 = vmax.f32 %v969, 0.0
  %v994 = vmax.f32 %v974, 0.0
  %v995 = vmax.f32 %v977, 0.0
  %v996 = vpack.c.bf16 %v981, %v980
  %v997 = vpack.c.bf16 %v983, %v982
  %v998 = vpack.c.bf16 %v985, %v984
  %v999 = vpack.c.bf16 %v987, %v986
  %v1000 = vpack.c.bf16 %v989, %v988
  %v1001 = vpack.c.bf16 %v991, %v990
  %v1002 = vpack.c.bf16 %v993, %v992
  %v1003 = vpack.c.bf16 %v995, %v994
  %s1004 = scalar_lea.vmem %s2, 256
  %v1005 = vld [vmem:[%s1004] sm:$0xf]
  %v1006 = vld [vmem:[%s1004 + $0x4] sm:$0xf]
  %v1007 = vld [vmem:[%s1004 + $0x8] sm:$0xf]
  %v1008 = vld [vmem:[%s1004 + $0xc] sm:$0xf]
  %v1009 = vld [vmem:[%s1004 + $0x10] sm:$0xf]
  %v1010 = vld [vmem:[%s1004 + $0x14] sm:$0xf]
  %v1011 = vld [vmem:[%s1004 + $0x18] sm:$0xf]
  %v1012 = vld [vmem:[%s1004 + $0x1c] sm:$0xf]
  %v1013 = vld [vmem:[%s1004 + $0x20] sm:$0xf]
  %v1014 = vld [vmem:[%s1004 + $0x24] sm:$0xf]
  %v1015 = vld [vmem:[%s1004 + $0x28] sm:$0xf]
  %v1016 = vld [vmem:[%s1004 + $0x2c] sm:$0xf]
  %v1017 = vld [vmem:[%s1004 + $0x30] sm:$0xf]
  %v1018 = vld [vmem:[%s1004 + $0x34] sm:$0xf]
  %v1019 = vld [vmem:[%s1004 + $0x38] sm:$0xf]
  %v1020 = vld [vmem:[%s1004 + $0x3c] sm:$0xf]
  %v1021 = vld [vmem:[%s3 + $0x5] sm:$0x1]
  %v1022 = vlaneseq
  %v1023 = vshrl.u32 %v1022, 7
  %v1024 = vsub.s32 0, %v1023
  %v1025 = vrot.slane %v1021, %v1024
  %v1042 = vunpack.c.l.b16 %v1005
  %v1043 = vunpack.c.l.b16 %v1006
  %v1044 = vunpack.c.l.b16 %v1007
  %v1045 = vunpack.c.l.b16 %v1008
  %v1046 = vunpack.c.l.b16 %v1009
  %v1047 = vunpack.c.l.b16 %v1010
  %v1048 = vunpack.c.l.b16 %v1011
  %v1049 = vunpack.c.l.b16 %v1012
  %v1050 = vunpack.c.l.b16 %v1013
  %v1051 = vunpack.c.l.b16 %v1014
  %v1052 = vunpack.c.l.b16 %v1015
  %v1053 = vunpack.c.l.b16 %v1016
  %v1054 = vunpack.c.l.b16 %v1017
  %v1055 = vunpack.c.l.b16 %v1018
  %v1056 = vunpack.c.l.b16 %v1019
  %v1057 = vunpack.c.l.b16 %v1020
  %v1058 = vpack.c.b16 %v1043, %v1042
  %v1059 = vpack.c.b16 %v1045, %v1044
  %v1060 = vpack.c.b16 %v1047, %v1046
  %v1061 = vpack.c.b16 %v1049, %v1048
  %v1062 = vpack.c.b16 %v1051, %v1050
  %v1063 = vpack.c.b16 %v1053, %v1052
  %v1064 = vpack.c.b16 %v1055, %v1054
  %v1065 = vpack.c.b16 %v1057, %v1056
  %1074 = vmatprep.subr.bf16.mxu0 0
  %1075 = vmatpush1.bf16.msra.mxu0 %v1065
  %1076 = vmatprep.subr.bf16.mxu0 0
  %1077 = vmatpush1.bf16.msra.mxu0 %v1064
  %1078 = vmatprep.subr.bf16.mxu0 0
  %1079 = vmatpush1.bf16.msra.mxu0 %v1063
  %1080 = vmatprep.subr.bf16.mxu0 0
  %1081 = vmatpush1.bf16.msra.mxu0 %v1062
  %1082 = vmatprep.subr.bf16.mxu0 0
  %1083 = vmatpush1.bf16.msra.mxu0 %v1061
  %1084 = vmatprep.subr.bf16.mxu0 0
  %1085 = vmatpush1.bf16.msra.mxu0 %v1060
  %1086 = vmatprep.subr.bf16.mxu0 0
  %1087 = vmatpush1.bf16.msra.mxu0 %v1059
  %1088 = vmatprep.subr.bf16.mxu0 0
  %1089 = vmatpush1.bf16.msra.mxu0 %v1058
  %1090 = vmatprep.subr.bf16.mxu0 0
  %1091 = vmatpush2.bf16.msra.mxu0 0
  %1092 = vmatprep.subr.bf16.mxu0 0
  %1093 = vmatpush2.bf16.msra.mxu0 0
  %1094 = vmatprep.subr.bf16.mxu0 0
  %1095 = vmatpush2.bf16.msra.mxu0 0
  %1096 = vmatprep.subr.bf16.mxu0 0
  %1097 = vmatpush2.bf16.msra.mxu0 0
  %1098 = vmatprep.subr.bf16.mxu0 0
  %1099 = vmatpush2.bf16.msra.mxu0 0
  %1100 = vmatprep.subr.bf16.mxu0 0
  %1101 = vmatpush2.bf16.msra.mxu0 0
  %1102 = vmatprep.subr.bf16.mxu0 0
  %1103 = vmatpush2.bf16.msra.mxu0 0
  %1104 = vmatprep.subr.bf16.mxu0 0
  %1105 = vmatpush2.bf16.msra.mxu0 0
  %1106 = vmatprep.mubr.bf16.mxu0 0
  %1107 = vmatmul.mubr.bf16.gmra.mxu0 %v996
  %v1108 = vpop.f32.mrf.mxu0
  %v1109 = vadd.f32 %v1025, %v1108
  %v1110 = vpop.f32.mrf.mxu0
  %v1111 = vpop.f32.mrf.mxu0
  %v1112 = vadd.f32 %v1025, %v1111
  %v1113 = vpop.f32.mrf.mxu0
  %1114 = vmatprep.mubr.bf16.mxu0 0
  %1115 = vmatmul.mubr.bf16.gmra.mxu0 %v997
  %v1116 = vpop.f32.mrf.mxu0
  %v1117 = vadd.f32 %v1025, %v1116
  %v1118 = vpop.f32.mrf.mxu0
  %v1119 = vpop.f32.mrf.mxu0
  %v1120 = vadd.f32 %v1025, %v1119
  %v1121 = vpop.f32.mrf.mxu0
  %1122 = vmatprep.mubr.bf16.mxu0 0
  %1123 = vmatmul.mubr.bf16.gmra.mxu0 %v998
  %v1124 = vpop.f32.mrf.mxu0
  %v1125 = vadd.f32 %v1025, %v1124
  %v1126 = vpop.f32.mrf.mxu0
  %v1127 = vpop.f32.mrf.mxu0
  %v1128 = vadd.f32 %v1025, %v1127
  %v1129 = vpop.f32.mrf.mxu0
  %1130 = vmatprep.mubr.bf16.mxu0 0
  %1131 = vmatmul.mubr.bf16.gmra.mxu0 %v999
  %v1132 = vpop.f32.mrf.mxu0
  %v1133 = vadd.f32 %v1025, %v1132
  %v1134 = vpop.f32.mrf.mxu0
  %v1135 = vpop.f32.mrf.mxu0
  %v1136 = vadd.f32 %v1025, %v1135
  %v1137 = vpop.f32.mrf.mxu0
  %1138 = vmatprep.mubr.bf16.mxu0 0
  %1139 = vmatmul.mubr.bf16.gmra.mxu0 %v1000
  %v1140 = vpop.f32.mrf.mxu0
  %v1141 = vadd.f32 %v1025, %v1140
  %v1142 = vpop.f32.mrf.mxu0
  %v1143 = vpop.f32.mrf.mxu0
  %v1144 = vadd.f32 %v1025, %v1143
  %v1145 = vpop.f32.mrf.mxu0
  %1146 = vmatprep.mubr.bf16.mxu0 0
  %1147 = vmatmul.mubr.bf16.gmra.mxu0 %v1001
  %v1148 = vpop.f32.mrf.mxu0
  %v1149 = vadd.f32 %v1025, %v1148
  %v1150 = vpop.f32.mrf.mxu0
  %v1151 = vpop.f32.mrf.mxu0
  %v1152 = vadd.f32 %v1025, %v1151
  %v1153 = vpop.f32.mrf.mxu0
  %1154 = vmatprep.mubr.bf16.mxu0 0
  %1155 = vmatmul.mubr.bf16.gmra.mxu0 %v1002
  %v1156 = vpop.f32.mrf.mxu0
  %v1157 = vadd.f32 %v1025, %v1156
  %v1158 = vpop.f32.mrf.mxu0
  %v1159 = vpop.f32.mrf.mxu0
  %v1160 = vadd.f32 %v1025, %v1159
  %v1161 = vpop.f32.mrf.mxu0
  %1162 = vmatprep.mubr.bf16.mxu0 0
  %1163 = vmatmul.mubr.bf16.gmra.mxu0 %v1003
  %v1164 = vpop.f32.mrf.mxu0
  %v1165 = vadd.f32 %v1025, %v1164
  %v1166 = vpop.f32.mrf.mxu0
  %v1167 = vpop.f32.mrf.mxu0
  %v1168 = vadd.f32 %v1025, %v1167
  %v1169 = vpop.f32.mrf.mxu0
  %1170 = vdwg.mxu0
  %v1171 = vmax.f32 %v1109, 0.0
  %v1172 = vmax.f32 %v1112, 0.0
  %v1173 = vmax.f32 %v1117, 0.0
  %v1174 = vmax.f32 %v1120, 0.0
  %v1175 = vmax.f32 %v1125, 0.0
  %v1176 = vmax.f32 %v1128, 0.0
  %v1177 = vmax.f32 %v1133, 0.0
  %v1178 = vmax.f32 %v1136, 0.0
  %v1179 = vmax.f32 %v1141, 0.0
  %v1180 = vmax.f32 %v1144, 0.0
  %v1181 = vmax.f32 %v1149, 0.0
  %v1182 = vmax.f32 %v1152, 0.0
  %v1183 = vmax.f32 %v1157, 0.0
  %v1184 = vmax.f32 %v1160, 0.0
  %v1185 = vmax.f32 %v1165, 0.0
  %v1186 = vmax.f32 %v1168, 0.0
  %v1187 = vpack.c.bf16 %v1172, %v1171
  %v1188 = vpack.c.bf16 %v1174, %v1173
  %v1189 = vpack.c.bf16 %v1176, %v1175
  %v1190 = vpack.c.bf16 %v1178, %v1177
  %v1191 = vpack.c.bf16 %v1180, %v1179
  %v1192 = vpack.c.bf16 %v1182, %v1181
  %v1193 = vpack.c.bf16 %v1184, %v1183
  %v1194 = vpack.c.bf16 %v1186, %v1185
  %s1195 = scalar_lea.vmem %s2, 320
  %v1196 = vld [vmem:[%s1195] sm:$0xf]
  %v1197 = vld [vmem:[%s1195 + $0x4] sm:$0xf]
  %v1198 = vld [vmem:[%s1195 + $0x8] sm:$0xf]
  %v1199 = vld [vmem:[%s1195 + $0xc] sm:$0xf]
  %v1200 = vld [vmem:[%s1195 + $0x10] sm:$0xf]
  %v1201 = vld [vmem:[%s1195 + $0x14] sm:$0xf]
  %v1202 = vld [vmem:[%s1195 + $0x18] sm:$0xf]
  %v1203 = vld [vmem:[%s1195 + $0x1c] sm:$0xf]
  %v1204 = vld [vmem:[%s1195 + $0x20] sm:$0xf]
  %v1205 = vld [vmem:[%s1195 + $0x24] sm:$0xf]
  %v1206 = vld [vmem:[%s1195 + $0x28] sm:$0xf]
  %v1207 = vld [vmem:[%s1195 + $0x2c] sm:$0xf]
  %v1208 = vld [vmem:[%s1195 + $0x30] sm:$0xf]
  %v1209 = vld [vmem:[%s1195 + $0x34] sm:$0xf]
  %v1210 = vld [vmem:[%s1195 + $0x38] sm:$0xf]
  %v1211 = vld [vmem:[%s1195 + $0x3c] sm:$0xf]
  %v1212 = vld [vmem:[%s3 + $0x6] sm:$0x1]
  %v1213 = vlaneseq
  %v1214 = vshrl.u32 %v1213, 7
  %v1215 = vsub.s32 0, %v1214
  %v1216 = vrot.slane %v1212, %v1215
  %v1233 = vunpack.c.l.b16 %v1196
  %v1234 = vunpack.c.l.b16 %v1197
  %v1235 = vunpack.c.l.b16 %v1198
  %v1236 = vunpack.c.l.b16 %v1199
  %v1237 = vunpack.c.l.b16 %v1200
  %v1238 = vunpack.c.l.b16 %v1201
  %v1239 = vunpack.c.l.b16 %v1202
  %v1240 = vunpack.c.l.b16 %v1203
  %v1241 = vunpack.c.l.b16 %v1204
  %v1242 = vunpack.c.l.b16 %v1205
  %v1243 = vunpack.c.l.b16 %v1206
  %v1244 = vunpack.c.l.b16 %v1207
  %v1245 = vunpack.c.l.b16 %v1208
  %v1246 = vunpack.c.l.b16 %v1209
  %v1247 = vunpack.c.l.b16 %v1210
  %v1248 = vunpack.c.l.b16 %v1211
  %v1249 = vpack.c.b16 %v1234, %v1233
  %v1250 = vpack.c.b16 %v1236, %v1235
  %v1251 = vpack.c.b16 %v1238, %v1237
  %v1252 = vpack.c.b16 %v1240, %v1239
  %v1253 = vpack.c.b16 %v1242, %v1241
  %v1254 = vpack.c.b16 %v1244, %v1243
  %v1255 = vpack.c.b16 %v1246, %v1245
  %v1256 = vpack.c.b16 %v1248, %v1247
  %1265 = vmatprep.subr.bf16.mxu0 0
  %1266 = vmatpush1.bf16.msra.mxu0 %v1256
  %1267 = vmatprep.subr.bf16.mxu0 0
  %1268 = vmatpush1.bf16.msra.mxu0 %v1255
  %1269 = vmatprep.subr.bf16.mxu0 0
  %1270 = vmatpush1.bf16.msra.mxu0 %v1254
  %1271 = vmatprep.subr.bf16.mxu0 0
  %1272 = vmatpush1.bf16.msra.mxu0 %v1253
  %1273 = vmatprep.subr.bf16.mxu0 0
  %1274 = vmatpush1.bf16.msra.mxu0 %v1252
  %1275 = vmatprep.subr.bf16.mxu0 0
  %1276 = vmatpush1.bf16.msra.mxu0 %v1251
  %1277 = vmatprep.subr.bf16.mxu0 0
  %1278 = vmatpush1.bf16.msra.mxu0 %v1250
  %1279 = vmatprep.subr.bf16.mxu0 0
  %1280 = vmatpush1.bf16.msra.mxu0 %v1249
  %1281 = vmatprep.subr.bf16.mxu0 0
  %1282 = vmatpush2.bf16.msra.mxu0 0
  %1283 = vmatprep.subr.bf16.mxu0 0
  %1284 = vmatpush2.bf16.msra.mxu0 0
  %1285 = vmatprep.subr.bf16.mxu0 0
  %1286 = vmatpush2.bf16.msra.mxu0 0
  %1287 = vmatprep.subr.bf16.mxu0 0
  %1288 = vmatpush2.bf16.msra.mxu0 0
  %1289 = vmatprep.subr.bf16.mxu0 0
  %1290 = vmatpush2.bf16.msra.mxu0 0
  %1291 = vmatprep.subr.bf16.mxu0 0
  %1292 = vmatpush2.bf16.msra.mxu0 0
  %1293 = vmatprep.subr.bf16.mxu0 0
  %1294 = vmatpush2.bf16.msra.mxu0 0
  %1295 = vmatprep.subr.bf16.mxu0 0
  %1296 = vmatpush2.bf16.msra.mxu0 0
  %1297 = vmatprep.mubr.bf16.mxu0 0
  %1298 = vmatmul.mubr.bf16.gmra.mxu0 %v1187
  %v1299 = vpop.f32.mrf.mxu0
  %v1300 = vadd.f32 %v1216, %v1299
  %v1301 = vpop.f32.mrf.mxu0
  %v1302 = vpop.f32.mrf.mxu0
  %v1303 = vadd.f32 %v1216, %v1302
  %v1304 = vpop.f32.mrf.mxu0
  %1305 = vmatprep.mubr.bf16.mxu0 0
  %1306 = vmatmul.mubr.bf16.gmra.mxu0 %v1188
  %v1307 = vpop.f32.mrf.mxu0
  %v1308 = vadd.f32 %v1216, %v1307
  %v1309 = vpop.f32.mrf.mxu0
  %v1310 = vpop.f32.mrf.mxu0
  %v1311 = vadd.f32 %v1216, %v1310
  %v1312 = vpop.f32.mrf.mxu0
  %1313 = vmatprep.mubr.bf16.mxu0 0
  %1314 = vmatmul.mubr.bf16.gmra.mxu0 %v1189
  %v1315 = vpop.f32.mrf.mxu0
  %v1316 = vadd.f32 %v1216, %v1315
  %v1317 = vpop.f32.mrf.mxu0
  %v1318 = vpop.f32.mrf.mxu0
  %v1319 = vadd.f32 %v1216, %v1318
  %v1320 = vpop.f32.mrf.mxu0
  %1321 = vmatprep.mubr.bf16.mxu0 0
  %1322 = vmatmul.mubr.bf16.gmra.mxu0 %v1190
  %v1323 = vpop.f32.mrf.mxu0
  %v1324 = vadd.f32 %v1216, %v1323
  %v1325 = vpop.f32.mrf.mxu0
  %v1326 = vpop.f32.mrf.mxu0
  %v1327 = vadd.f32 %v1216, %v1326
  %v1328 = vpop.f32.mrf.mxu0
  %1329 = vmatprep.mubr.bf16.mxu0 0
  %1330 = vmatmul.mubr.bf16.gmra.mxu0 %v1191
  %v1331 = vpop.f32.mrf.mxu0
  %v1332 = vadd.f32 %v1216, %v1331
  %v1333 = vpop.f32.mrf.mxu0
  %v1334 = vpop.f32.mrf.mxu0
  %v1335 = vadd.f32 %v1216, %v1334
  %v1336 = vpop.f32.mrf.mxu0
  %1337 = vmatprep.mubr.bf16.mxu0 0
  %1338 = vmatmul.mubr.bf16.gmra.mxu0 %v1192
  %v1339 = vpop.f32.mrf.mxu0
  %v1340 = vadd.f32 %v1216, %v1339
  %v1341 = vpop.f32.mrf.mxu0
  %v1342 = vpop.f32.mrf.mxu0
  %v1343 = vadd.f32 %v1216, %v1342
  %v1344 = vpop.f32.mrf.mxu0
  %1345 = vmatprep.mubr.bf16.mxu0 0
  %1346 = vmatmul.mubr.bf16.gmra.mxu0 %v1193
  %v1347 = vpop.f32.mrf.mxu0
  %v1348 = vadd.f32 %v1216, %v1347
  %v1349 = vpop.f32.mrf.mxu0
  %v1350 = vpop.f32.mrf.mxu0
  %v1351 = vadd.f32 %v1216, %v1350
  %v1352 = vpop.f32.mrf.mxu0
  %1353 = vmatprep.mubr.bf16.mxu0 0
  %1354 = vmatmul.mubr.bf16.gmra.mxu0 %v1194
  %v1355 = vpop.f32.mrf.mxu0
  %v1356 = vadd.f32 %v1216, %v1355
  %v1357 = vpop.f32.mrf.mxu0
  %v1358 = vpop.f32.mrf.mxu0
  %v1359 = vadd.f32 %v1216, %v1358
  %v1360 = vpop.f32.mrf.mxu0
  %1361 = vdwg.mxu0
  %v1362 = vmax.f32 %v1300, 0.0
  %v1363 = vmax.f32 %v1303, 0.0
  %v1364 = vmax.f32 %v1308, 0.0
  %v1365 = vmax.f32 %v1311, 0.0
  %v1366 = vmax.f32 %v1316, 0.0
  %v1367 = vmax.f32 %v1319, 0.0
  %v1368 = vmax.f32 %v1324, 0.0
  %v1369 = vmax.f32 %v1327, 0.0
  %v1370 = vmax.f32 %v1332, 0.0
  %v1371 = vmax.f32 %v1335, 0.0
  %v1372 = vmax.f32 %v1340, 0.0
  %v1373 = vmax.f32 %v1343, 0.0
  %v1374 = vmax.f32 %v1348, 0.0
  %v1375 = vmax.f32 %v1351, 0.0
  %v1376 = vmax.f32 %v1356, 0.0
  %v1377 = vmax.f32 %v1359, 0.0
  %v1378 = vld [vmem:[%s3 + $0x8] sm:$0xff]
  %1379 = vmatprep.subr.mxu0 0.0
  %1380 = vmatpush1.xpose.msra.mxu0 %v1377
  %1381 = vmatprep.subr.mxu0 0.0
  %1382 = vmatpush1.xpose.msra.mxu0 %v1376
  %1383 = vmatprep.subr.mxu0 0.0
  %1384 = vmatpush1.xpose.msra.mxu0 %v1375
  %1385 = vmatprep.subr.mxu0 0.0
  %1386 = vmatpush1.xpose.msra.mxu0 %v1374
  %1387 = vmatprep.subr.mxu0 0.0
  %1388 = vmatpush1.xpose.msra.mxu0 %v1373
  %1389 = vmatprep.subr.mxu0 0.0
  %1390 = vmatpush1.xpose.msra.mxu0 %v1372
  %1391 = vmatprep.subr.mxu0 0.0
  %1392 = vmatpush1.xpose.msra.mxu0 %v1371
  %1393 = vmatprep.subr.mxu0 0.0
  %1394 = vmatpush1.xpose.msra.mxu0 %v1370
  %1395 = vmatprep.subr.mxu0 0.0
  %1396 = vmatpush1.xpose.msra.mxu0 %v1369
  %1397 = vmatprep.subr.mxu0 0.0
  %1398 = vmatpush1.xpose.msra.mxu0 %v1368
  %1399 = vmatprep.subr.mxu0 0.0
  %1400 = vmatpush1.xpose.msra.mxu0 %v1367
  %1401 = vmatprep.subr.mxu0 0.0
  %1402 = vmatpush1.xpose.msra.mxu0 %v1366
  %1403 = vmatprep.subr.mxu0 0.0
  %1404 = vmatpush1.xpose.msra.mxu0 %v1365
  %1405 = vmatprep.subr.mxu0 0.0
  %1406 = vmatpush1.xpose.msra.mxu0 %v1364
  %1407 = vmatprep.subr.mxu0 0.0
  %1408 = vmatpush1.xpose.msra.mxu0 %v1363
  %1409 = vmatprep.subr.mxu0 0.0
  %1410 = vmatpush1.xpose.msra.mxu0 %v1362
  %1411 = vmatprep.subr.mxu0 0.0
  %1412 = vmatpush2.xpose.msra.mxu0 0.0
  %1413 = vmatprep.subr.mxu0 0.0
  %1414 = vmatpush2.xpose.msra.mxu0 0.0
  %1415 = vmatprep.subr.mxu0 0.0
  %1416 = vmatpush2.xpose.msra.mxu0 0.0
  %1417 = vmatprep.subr.mxu0 0.0
  %1418 = vmatpush2.xpose.msra.mxu0 0.0
  %1419 = vmatprep.subr.mxu0 0.0
  %1420 = vmatpush2.xpose.msra.mxu0 0.0
  %1421 = vmatprep.subr.mxu0 0.0
  %1422 = vmatpush2.xpose.msra.mxu0 0.0
  %1423 = vmatprep.subr.mxu0 0.0
  %1424 = vmatpush2.xpose.msra.mxu0 0.0
  %1425 = vmatprep.subr.mxu0 0.0
  %1426 = vmatpush2.xpose.msra.mxu0 0.0
  %1427 = vmatprep.subr.mxu0 0.0
  %1428 = vmatpush2.xpose.msra.mxu0 0.0
  %1429 = vmatprep.subr.mxu0 0.0
  %1430 = vmatpush2.xpose.msra.mxu0 0.0
  %1431 = vmatprep.subr.mxu0 0.0
  %1432 = vmatpush2.xpose.msra.mxu0 0.0
  %1433 = vmatprep.subr.mxu0 0.0
  %1434 = vmatpush2.xpose.msra.mxu0 0.0
  %1435 = vmatprep.subr.mxu0 0.0
  %1436 = vmatpush2.xpose.msra.mxu0 0.0
  %1437 = vmatprep.subr.mxu0 0.0
  %1438 = vmatpush2.xpose.msra.mxu0 0.0
  %1439 = vmatprep.subr.mxu0 0.0
  %1440 = vmatpush2.xpose.msra.mxu0 0.0
  %1441 = vmatprep.subr.mxu0 0.0
  %1442 = vmatpush2.xpose.msra.mxu0 0.0
  %1443 = vmatprep.mubr.f32.mxu0 0.0
  %1444 = vmatmul.mubr.f32.gmra.mxu0 %v1378
  %v1445 = vpop.f32.mrf.mxu0
  %v1446 = vadd.f32 0.0, %v1445
  %v1447 = vpop.f32.mrf.mxu0
  %1448 = vdwg.mxu0
  %v1449 = vld [vmem:[%s3 + $0x7] sm:$0x1]
  %1451 = vset.pattern.permute.xlu0 0
  %1452 = vperm.xlu0 %1451, %v1449
  %v1453 = vpop.permute.xlu0 %1452
  %v1455 = vadd.f32 %v1446, %v1453
  %v1456 = vsub.f32 0.0, %v1455
  %v1457 = vmul.f32 %v1456, 1.442695
  %v1458 = vpow.pop %v1457
  %v1459 = vadd.f32 %v1458, 1.0
  %v1460 = vrcp.pop %v1459
  %1461 = vst [vmem:[%s4] sm:$0x1] %v1460
  // Predicated region
  $region18: #{backgammon_net_forward.1} parent=0 // pred_check
    _
  $region19: #{backgammon_net_forward.1} parent=0 // pred_check_branch
    %1463 = sbr.rel (0) target = $region21
  $region20: #{backgammon_net_forward.1} parent=0 // pred_region
    _
  $region21: #{backgammon_net_forward.1} parent=0 // pred_fallthru
    _
  // Predicated region
  $region22: #{backgammon_net_forward.1} parent=0 // pred_check
    _
  $region23: #{backgammon_net_forward.1} parent=0 // pred_check_branch
    %1465 = sbr.rel (0) target = $region25
  $region24: #{backgammon_net_forward.1} parent=0 // pred_region
    _
  $region25: #{backgammon_net_forward.1} parent=0 // pred_fallthru
    _

</llo_original>
